<compile_context>
chip_gen: v5e
topology: v5e:2x2
jax: 0.10.0
libtpu: 0.0.40
codegen_flags: <defaults>
</compile_context>

<pallas_src>
import numpy as np
import jax
import jax.numpy as jnp
from jax.experimental import pallas as pl
from jax.experimental.pallas import tpu as pltpu

POOL_SIZE = 8      # analogue of the 112x112 face_pool target, at small scale
EMBED_DIM = 512    # IR-SE-50 embedding dimension


# ----------------------------------------------------------------------------
# Fused kernel
# ----------------------------------------------------------------------------
def _id_loss_fused_kernel(x_ref, xh_ref, wpool_ref, w_ref, scale_ref,
                          shift_ref, o_ref):
    """Fused IDLoss forward.

    x_ref    : (B, C*H*W)     f32   original images, flattened
    xh_ref   : (B, C*H*W)     f32   reconstructed images, flattened
    wpool_ref: (C*H*W, C*P*P) bf16  exact AdaptiveAvgPool2d + Flatten as matmul
    w_ref    : (C*P*P, D)     bf16  backbone-head Linear weight
    scale_ref: (1, D)         f32   BN-affine scale
    shift_ref: (1, D)         f32   BN-affine shift
    o_ref    : (1, B)         f32   lane-dense per-sample losses
    """
    # Weight tiles are loaded from VMEM once and reused for both chains.
    wpool = wpool_ref[...]
    w = w_ref[...]
    scale = scale_ref[...]
    shift = shift_ref[...]

    def head(img_f32):
        # AdaptiveAvgPool2d((P, P)) + Flatten as a single MXU matmul.
        pooled = jnp.dot(img_f32.astype(jnp.bfloat16), wpool,
                         preferred_element_type=jnp.float32)
        # Backbone output head: Linear -> BN-affine -> L2 normalize.
        z = jnp.dot(pooled.astype(jnp.bfloat16), w,
                    preferred_element_type=jnp.float32)
        z = z * scale + shift
        inv_norm = jax.lax.rsqrt(
            jnp.sum(z * z, axis=-1, keepdims=True) + 1e-8)
        return z * inv_norm                             # (B, D) unit rows

    e_x = head(x_ref[...])
    e_hat = head(xh_ref[...])

    # losses[i] = 1 - dot(x_hat_feats[i], x_feats[i]); emitted lane-dense as
    # (1, B) via a tiny BxB Gram matmul + diagonal mask (avoids a (B, 1)
    # masked-lane store and any sublane->lane reshape).
    g = jnp.einsum('nd,md->nm', e_hat, e_x,
                   preferred_element_type=jnp.float32)  # (B, B)
    ri = jax.lax.broadcasted_iota(jnp.int32, g.shape, 0)
    ci = jax.lax.broadcasted_iota(jnp.int32, g.shape, 1)
    d = jnp.sum(jnp.where(ri == ci, g, 0.0), axis=0, keepdims=True)   # (1, B)
    o_ref[...] = (1.0 - d).astype(o_ref.dtype)


# ----------------------------------------------------------------------------
# Host-side constant construction + wrapper
# ----------------------------------------------------------------------------
def _pool_matrix(in_size, out_size):
    """Exact AdaptiveAvgPool2d 1-D averaging matrix, shape (out_size, in_size)."""
    m = np.zeros((out_size, in_size), np.float32)
    for i in range(out_size):
        start = (i * in_size) // out_size
        end = -((-(i + 1) * in_size) // out_size)      # ceil((i+1)*in/out)
        m[i, start:end] = 1.0 / float(end - start)
    return m


def _pool_flatten_matrix(c, h, w, p):
    """(C*H*W, C*P*P) matrix M with x.reshape(N,-1) @ M == flatten(AdaptiveAvgPool2d(x))."""
    ah = _pool_matrix(h, p)                            # (P, H)
    aw = _pool_matrix(w, p)                            # (P, W)
    # kron(ah.T, aw.T)[h*W + w, p*P + q] = ah[p, h] * aw[q, w]
    blk = np.kron(ah.T, aw.T)                          # (H*W, P*P)
    m = np.zeros((c * h * w, c * p * p), np.float32)
    for ci in range(c):
        m[ci * h * w:(ci + 1) * h * w, ci * p * p:(ci + 1) * p * p] = blk
    return jnp.asarray(m, dtype=jnp.bfloat16)          # exact for pow-of-2 windows


def id_loss_forward(x, x_hat, params):
    """Forward of IDLoss: per-sample 1 - dot(x_hat_feats, x_feats), shape (B,).

    Note: the reference's batch==1 duplicate-then-slice path in extract_feats
    is dropped — the backbone is frozen/eval, so duplicating the sample and
    discarding the second row returns identical values; sublane padding already
    handles B == 1 on TPU.
    """
    b, c, h, w = x.shape
    # (N, C, H, W) -> (N, C*H*W): zero-copy bitcast on the host; both stacks go
    # into one kernel so the weight matrices are DMA'd from HBM a single time.
    x2 = x.reshape(b, c * h * w)
    xh2 = x_hat.reshape(b, c * h * w)
    vmem = pl.BlockSpec(memory_space=pltpu.MemorySpace.VMEM)
    losses = pl.pallas_call(
        _id_loss_fused_kernel,
        out_shape=jax.ShapeDtypeStruct((1, b), jnp.float32),
        in_specs=[vmem] * 6,
        out_specs=vmem,
    )(x2, xh2, params["w_pool"], params["w"], params["scale"], params["shift"])
    return losses[0]                                    # shape (B,)


def make_params(key, in_channels, height, width):
    """Deterministic synthetic weights for the backbone output head."""
    feat_dim = in_channels * POOL_SIZE * POOL_SIZE
    k_w, k_scale, k_shift = jax.random.split(key, 3)
    w = (jax.random.normal(k_w, (feat_dim, EMBED_DIM), jnp.float32)
         / np.sqrt(feat_dim)).astype(jnp.bfloat16)
    scale = 1.0 + 0.1 * jax.random.normal(k_scale, (1, EMBED_DIM), jnp.float32)
    shift = 0.05 * jax.random.normal(k_shift, (1, EMBED_DIM), jnp.float32)
    return {
        "w_pool": _pool_flatten_matrix(in_channels, height, width, POOL_SIZE),
        "w": w,
        "scale": scale,
        "shift": shift,
    }


# ----------------------------------------------------------------------------
# Demo
# ----------------------------------------------------------------------------
if __name__ == "__main__":
    key = jax.random.PRNGKey(0)
    k_x, k_xh, k_p = jax.random.split(key, 3)

    N, C, H, W = 2, 3, 16, 16
    x = jax.random.normal(k_x, (N, C, H, W), jnp.float32)
    x_hat = jax.random.normal(k_xh, (N, C, H, W), jnp.float32)
    params = make_params(k_p, C, H, W)

    losses = jax.block_until_ready(id_loss_forward(x, x_hat, params))
    assert losses.shape == (N,)
    assert bool(jnp.all(jnp.isfinite(losses)))

    # batch == 1 path (equivalent to the reference's duplicate-then-slice)
    l1 = jax.block_until_ready(id_loss_forward(x[:1], x_hat[:1], params))
    assert l1.shape == (1,)
    assert bool(jnp.all(jnp.isfinite(l1)))

    print("KERNEL_OK")
</pallas_src>

<mosaic_0001>
module attributes {stable_mosaic.version = 11 : i64} {
  func.func @_id_loss_fused_kernel(%arg0: memref<2x768xf32, #tpu.memory_space<vmem>>, %arg1: memref<2x768xf32, #tpu.memory_space<vmem>>, %arg2: memref<768x192xbf16, #tpu.memory_space<vmem>>, %arg3: memref<192x512xbf16, #tpu.memory_space<vmem>>, %arg4: memref<1x512xf32, #tpu.memory_space<vmem>>, %arg5: memref<1x512xf32, #tpu.memory_space<vmem>>, %arg6: memref<1x2xf32, #tpu.memory_space<vmem>>) attributes {dimension_semantics = [], scalar_prefetch = 0 : i64, scratch_operands = 0 : i64, tpu.core_type = #tpu.core_type<tc>} {
    %c0 = arith.constant 0 : index
    %c0_0 = arith.constant 0 : index
    %0 = vector.load %arg2[%c0, %c0_0] : memref<768x192xbf16, #tpu.memory_space<vmem>>, vector<768x192xbf16>
    %c0_1 = arith.constant 0 : index
    %c0_2 = arith.constant 0 : index
    %1 = vector.load %arg3[%c0_1, %c0_2] : memref<192x512xbf16, #tpu.memory_space<vmem>>, vector<192x512xbf16>
    %c0_3 = arith.constant 0 : index
    %c0_4 = arith.constant 0 : index
    %2 = vector.load %arg4[%c0_3, %c0_4] : memref<1x512xf32, #tpu.memory_space<vmem>>, vector<1x512xf32>
    %c0_5 = arith.constant 0 : index
    %c0_6 = arith.constant 0 : index
    %3 = vector.load %arg5[%c0_5, %c0_6] : memref<1x512xf32, #tpu.memory_space<vmem>>, vector<1x512xf32>
    %c0_7 = arith.constant 0 : index
    %c0_8 = arith.constant 0 : index
    %4 = vector.load %arg0[%c0_7, %c0_8] : memref<2x768xf32, #tpu.memory_space<vmem>>, vector<2x768xf32>
    %5 = arith.truncf %4 : vector<2x768xf32> to vector<2x768xbf16>
    %cst = arith.constant dense<0.000000e+00> : vector<2x192xf32>
    %6 = tpu.matmul %5, %0, %cst {dimension_numbers = #tpu.dot_dimension_numbers<[1], [0], [0], [1], [0, 0, 1, 1], [], []>} : vector<2x768xbf16>, vector<768x192xbf16>, vector<2x192xf32> -> vector<2x192xf32>
    %7 = arith.truncf %6 : vector<2x192xf32> to vector<2x192xbf16>
    %cst_9 = arith.constant dense<0.000000e+00> : vector<2x512xf32>
    %8 = tpu.matmul %7, %1, %cst_9 {dimension_numbers = #tpu.dot_dimension_numbers<[1], [0], [0], [1], [0, 0, 1, 1], [], []>} : vector<2x192xbf16>, vector<192x512xbf16>, vector<2x512xf32> -> vector<2x512xf32>
    %9 = vector.broadcast %2 : vector<1x512xf32> to vector<2x512xf32>
    %10 = arith.mulf %8, %9 : vector<2x512xf32>
    %11 = vector.broadcast %3 : vector<1x512xf32> to vector<2x512xf32>
    %12 = arith.addf %10, %11 : vector<2x512xf32>
    %13 = arith.mulf %12, %12 : vector<2x512xf32>
    %cst_10 = arith.constant dense<0.000000e+00> : vector<2xf32>
    %14 = vector.multi_reduction <add>, %13, %cst_10 [1] : vector<2x512xf32> to vector<2xf32>
    %15 = vector.shape_cast %14 : vector<2xf32> to vector<2x1xf32>
    %cst_11 = arith.constant 9.99999993E-9 : f32
    %16 = vector.broadcast %cst_11 : f32 to vector<2x1xf32>
    %17 = arith.addf %15, %16 : vector<2x1xf32>
    %18 = math.rsqrt %17 : vector<2x1xf32>
    %19 = vector.broadcast %18 : vector<2x1xf32> to vector<2x512xf32>
    %20 = arith.mulf %12, %19 : vector<2x512xf32>
    %c0_12 = arith.constant 0 : index
    %c0_13 = arith.constant 0 : index
    %21 = vector.load %arg1[%c0_12, %c0_13] : memref<2x768xf32, #tpu.memory_space<vmem>>, vector<2x768xf32>
    %22 = arith.truncf %21 : vector<2x768xf32> to vector<2x768xbf16>
    %cst_14 = arith.constant dense<0.000000e+00> : vector<2x192xf32>
    %23 = tpu.matmul %22, %0, %cst_14 {dimension_numbers = #tpu.dot_dimension_numbers<[1], [0], [0], [1], [0, 0, 1, 1], [], []>} : vector<2x768xbf16>, vector<768x192xbf16>, vector<2x192xf32> -> vector<2x192xf32>
    %24 = arith.truncf %23 : vector<2x192xf32> to vector<2x192xbf16>
    %cst_15 = arith.constant dense<0.000000e+00> : vector<2x512xf32>
    %25 = tpu.matmul %24, %1, %cst_15 {dimension_numbers = #tpu.dot_dimension_numbers<[1], [0], [0], [1], [0, 0, 1, 1], [], []>} : vector<2x192xbf16>, vector<192x512xbf16>, vector<2x512xf32> -> vector<2x512xf32>
    %26 = vector.broadcast %2 : vector<1x512xf32> to vector<2x512xf32>
    %27 = arith.mulf %25, %26 : vector<2x512xf32>
    %28 = vector.broadcast %3 : vector<1x512xf32> to vector<2x512xf32>
    %29 = arith.addf %27, %28 : vector<2x512xf32>
    %30 = arith.mulf %29, %29 : vector<2x512xf32>
    %cst_16 = arith.constant dense<0.000000e+00> : vector<2xf32>
    %31 = vector.multi_reduction <add>, %30, %cst_16 [1] : vector<2x512xf32> to vector<2xf32>
    %32 = vector.shape_cast %31 : vector<2xf32> to vector<2x1xf32>
    %cst_17 = arith.constant 9.99999993E-9 : f32
    %33 = vector.broadcast %cst_17 : f32 to vector<2x1xf32>
    %34 = arith.addf %32, %33 : vector<2x1xf32>
    %35 = math.rsqrt %34 : vector<2x1xf32>
    %36 = vector.broadcast %35 : vector<2x1xf32> to vector<2x512xf32>
    %37 = arith.mulf %29, %36 : vector<2x512xf32>
    "tpu.trace_start"() <{level = 10 : i32, message = "nd,md->nm"}> : () -> ()
    %cst_18 = arith.constant dense<0.000000e+00> : vector<2x2xf32>
    %38 = tpu.matmul %37, %20, %cst_18 {dimension_numbers = #tpu.dot_dimension_numbers<[1], [1], [0], [0], [0, 0, 1, 0], [], []>} : vector<2x512xf32>, vector<2x512xf32>, vector<2x2xf32> -> vector<2x2xf32>
    "tpu.trace_stop"() : () -> ()
    %39 = tpu.iota {dimensions = array<i32: 0>} : vector<2x2xi32>
    %40 = tpu.iota {dimensions = array<i32: 1>} : vector<2x2xi32>
    %41 = arith.cmpi eq, %39, %40 : vector<2x2xi32>
    %cst_19 = arith.constant 0.000000e+00 : f32
    %42 = vector.broadcast %cst_19 : f32 to vector<2x2xf32>
    %43 = arith.select %41, %38, %42 : vector<2x2xi1>, vector<2x2xf32>
    %cst_20 = arith.constant dense<0.000000e+00> : vector<2xf32>
    %44 = vector.multi_reduction <add>, %43, %cst_20 [0] : vector<2x2xf32> to vector<2xf32>
    %45 = vector.shape_cast %44 : vector<2xf32> to vector<1x2xf32>
    %cst_21 = arith.constant 1.000000e+00 : f32
    %46 = vector.broadcast %cst_21 : f32 to vector<1x2xf32>
    %47 = arith.subf %46, %45 : vector<1x2xf32>
    %c0_22 = arith.constant 0 : index
    %c0_23 = arith.constant 0 : index
    %48 = vector.load %arg6[%c0_22, %c0_23] : memref<1x2xf32, #tpu.memory_space<vmem>>, vector<1x2xf32>
    tpu.vector_store %arg6[%c0_22, %c0_23], %47 {strides = array<i32>} : memref<1x2xf32, #tpu.memory_space<vmem>>, vector<1x2xf32>,
    return
  }
}

</mosaic_0001>

<llo_original>
// kernel: tpu_custom_call.1
$region0: #{tpu_custom_call.1}
  #allocation0 [shape = 'u32[]', space=smem, size = 0x4, offset = 0x4, fixed_abs, tag = 'smem constant byte address 0x4 - core index']
  #allocation1 [shape = 'u32[72,128]{1,0:T(1,128)}', space=vmem, size = 0x9000, scoped, tag = 'internal scratch']
  %s0 = inlined_call_operand.vmem [shape: f32[2,768], index: 0, kind: input, shape index: {}]
  %s1 = inlined_call_operand.vmem [shape: f32[2,768], index: 1, kind: input, shape index: {}]
  %s2 = inlined_call_operand.vmem [shape: bf16[768,192], index: 2, kind: input, shape index: {}]
  %s3 = inlined_call_operand.vmem [shape: bf16[192,512], index: 3, kind: input, shape index: {}]
  %s4 = inlined_call_operand.vmem [shape: f32[1,512], index: 4, kind: input, shape index: {}]
  %s5 = inlined_call_operand.vmem [shape: f32[1,512], index: 5, kind: input, shape index: {}]
  %s6 = inlined_call_operand.hbm [shape: f32[1,2], index: 6, kind: output, shape index: {}]
  %s7 = sld [smem:[#allocation0]]
  $region34: #{tpu_custom_call.1} parent=0
    _
  %s9 = ssub.s32 1, %s7
  %s10 = scalar_select 0, %s9, %s7
  $region1: #{tpu_custom_call.1} parent=0
    #allocation2 [shape = 'u8[512]{0}', space=vmem, size = 0x400, scoped, tag = 'output window, operand 0, single buffered']
    #allocation3 [shape = 's32[1]{0}', space=sflag, size = 0x4, scoped, tag = 'scoped memory for tpu_custom_call.1']
    %11 = vsyncpa [#allocation3], 0
    // Predicated region
    $region2: #{tpu_custom_call.1} parent=1 // pred_check
      _
    $region3: #{tpu_custom_call.1} parent=1 // pred_check_branch
      %13 = sbr.rel (0) target = $region5
    $region4: #{tpu_custom_call.1} parent=1 // pred_region
      _
    $region5: #{tpu_custom_call.1} parent=1 // pred_fallthru
      _
    // Predicated region
    $region6: #{tpu_custom_call.1} parent=1 // pred_check
      _
    $region7: #{tpu_custom_call.1} parent=1 // pred_check_branch
      %15 = sbr.rel (0) target = $region9
    $region8: #{tpu_custom_call.1} parent=1 // pred_region
      _
    $region9: #{tpu_custom_call.1} parent=1 // pred_fallthru
      _
    // Predicated region
    $region10: #{tpu_custom_call.1} parent=1 // pred_check
      _
    $region11: #{tpu_custom_call.1} parent=1 // pred_check_branch
      %17 = sbr.rel (0) target = $region13
    $region12: #{tpu_custom_call.1} parent=1 // pred_region
      _
    $region13: #{tpu_custom_call.1} parent=1 // pred_fallthru
      _
    // Predicated region
    $region14: #{tpu_custom_call.1} parent=1 // pred_check
      _
    $region15: #{tpu_custom_call.1} parent=1 // pred_check_branch
      %19 = sbr.rel (0) target = $region17
    $region16: #{tpu_custom_call.1} parent=1 // pred_region
      _
    $region17: #{tpu_custom_call.1} parent=1 // pred_fallthru
      _
    // Predicated region
    $region18: #{tpu_custom_call.1} parent=1 // pred_check
      _
    $region19: #{tpu_custom_call.1} parent=1 // pred_check_branch
      %21 = sbr.rel (0) target = $region21
    $region20: #{tpu_custom_call.1} parent=1 // pred_region
      _
    $region21: #{tpu_custom_call.1} parent=1 // pred_fallthru
      _
    // Predicated region
    $region22: #{tpu_custom_call.1} parent=1 // pred_check
      _
    $region23: #{tpu_custom_call.1} parent=1 // pred_check_branch
      %23 = sbr.rel (0) target = $region25
    $region24: #{tpu_custom_call.1} parent=1 // pred_region
      _
    $region25: #{tpu_custom_call.1} parent=1 // pred_fallthru
      _
    %v25 = vld [vmem:[%s2] sm:$0xff]
    %v26 = vld [vmem:[%s2 + $0x8] sm:$0xff]
    %v27 = vld [vmem:[%s2 + $0x10] sm:$0xff]
    %v28 = vld [vmem:[%s2 + $0x18] sm:$0xff]
    %v29 = vld [vmem:[%s2 + $0x20] sm:$0xff]
    %v30 = vld [vmem:[%s2 + $0x28] sm:$0xff]
    %v31 = vld [vmem:[%s2 + $0x30] sm:$0xff]
    %v32 = vld [vmem:[%s2 + $0x38] sm:$0xff]
    %v33 = vld [vmem:[%s2 + $0x40] sm:$0xff]
    %v34 = vld [vmem:[%s2 + $0x48] sm:$0xff]
    %v35 = vld [vmem:[%s2 + $0x50] sm:$0xff]
    %v36 = vld [vmem:[%s2 + $0x58] sm:$0xff]
    %v37 = vld [vmem:[%s2 + $0x60] sm:$0xff]
    %v38 = vld [vmem:[%s2 + $0x68] sm:$0xff]
    %v39 = vld [vmem:[%s2 + $0x70] sm:$0xff]
    %v40 = vld [vmem:[%s2 + $0x78] sm:$0xff]
    %v41 = vld [vmem:[%s2 + $0x80] sm:$0xff]
    %v42 = vld [vmem:[%s2 + $0x88] sm:$0xff]
    %v43 = vld [vmem:[%s2 + $0x90] sm:$0xff]
    %v44 = vld [vmem:[%s2 + $0x98] sm:$0xff]
    %v45 = vld [vmem:[%s2 + $0xa0] sm:$0xff]
    %v46 = vld [vmem:[%s2 + $0xa8] sm:$0xff]
    %v47 = vld [vmem:[%s2 + $0xb0] sm:$0xff]
    %v48 = vld [vmem:[%s2 + $0xb8] sm:$0xff]
    %v49 = vld [vmem:[%s2 + $0xc0] sm:$0xff]
    %v50 = vld [vmem:[%s2 + $0xc8] sm:$0xff]
    %v51 = vld [vmem:[%s2 + $0xd0] sm:$0xff]
    %v52 = vld [vmem:[%s2 + $0xd8] sm:$0xff]
    %v53 = vld [vmem:[%s2 + $0xe0] sm:$0xff]
    %v54 = vld [vmem:[%s2 + $0xe8] sm:$0xff]
    %v55 = vld [vmem:[%s2 + $0xf0] sm:$0xff]
    %v56 = vld [vmem:[%s2 + $0xf8] sm:$0xff]
    %v57 = vld [vmem:[%s2 + $0x100] sm:$0xff]
    %v58 = vld [vmem:[%s2 + $0x108] sm:$0xff]
    %v59 = vld [vmem:[%s2 + $0x110] sm:$0xff]
    %v60 = vld [vmem:[%s2 + $0x118] sm:$0xff]
    %v61 = vld [vmem:[%s2 + $0x120] sm:$0xff]
    %v62 = vld [vmem:[%s2 + $0x128] sm:$0xff]
    %v63 = vld [vmem:[%s2 + $0x130] sm:$0xff]
    %v64 = vld [vmem:[%s2 + $0x138] sm:$0xff]
    %v65 = vld [vmem:[%s2 + $0x140] sm:$0xff]
    %v66 = vld [vmem:[%s2 + $0x148] sm:$0xff]
    %v67 = vld [vmem:[%s2 + $0x150] sm:$0xff]
    %v68 = vld [vmem:[%s2 + $0x158] sm:$0xff]
    %v69 = vld [vmem:[%s2 + $0x160] sm:$0xff]
    %v70 = vld [vmem:[%s2 + $0x168] sm:$0xff]
    %v71 = vld [vmem:[%s2 + $0x170] sm:$0xff]
    %v72 = vld [vmem:[%s2 + $0x178] sm:$0xff]
    %v73 = vld [vmem:[%s2 + $0x180] sm:$0xff]
    %v74 = vld [vmem:[%s2 + $0x188] sm:$0xff]
    %v75 = vld [vmem:[%s2 + $0x190] sm:$0xff]
    %v76 = vld [vmem:[%s2 + $0x198] sm:$0xff]
    %v77 = vld [vmem:[%s2 + $0x1a0] sm:$0xff]
    %v78 = vld [vmem:[%s2 + $0x1a8] sm:$0xff]
    %v79 = vld [vmem:[%s2 + $0x1b0] sm:$0xff]
    %v80 = vld [vmem:[%s2 + $0x1b8] sm:$0xff]
    %v81 = vld [vmem:[%s2 + $0x1c0] sm:$0xff]
    %v82 = vld [vmem:[%s2 + $0x1c8] sm:$0xff]
    %v83 = vld [vmem:[%s2 + $0x1d0] sm:$0xff]
    %v84 = vld [vmem:[%s2 + $0x1d8] sm:$0xff]
    %v85 = vld [vmem:[%s2 + $0x1e0] sm:$0xff]
    %v86 = vld [vmem:[%s2 + $0x1e8] sm:$0xff]
    %v87 = vld [vmem:[%s2 + $0x1f0] sm:$0xff]
    %v88 = vld [vmem:[%s2 + $0x1f8] sm:$0xff]
    %v89 = vld [vmem:[%s2 + $0x200] sm:$0xff]
    %v90 = vld [vmem:[%s2 + $0x208] sm:$0xff]
    %v91 = vld [vmem:[%s2 + $0x210] sm:$0xff]
    %v92 = vld [vmem:[%s2 + $0x218] sm:$0xff]
    %v93 = vld [vmem:[%s2 + $0x220] sm:$0xff]
    %v94 = vld [vmem:[%s2 + $0x228] sm:$0xff]
    %v95 = vld [vmem:[%s2 + $0x230] sm:$0xff]
    %v96 = vld [vmem:[%s2 + $0x238] sm:$0xff]
    %v97 = vld [vmem:[%s2 + $0x240] sm:$0xff]
    %v98 = vld [vmem:[%s2 + $0x248] sm:$0xff]
    %v99 = vld [vmem:[%s2 + $0x250] sm:$0xff]
    %v100 = vld [vmem:[%s2 + $0x258] sm:$0xff]
    %v101 = vld [vmem:[%s2 + $0x260] sm:$0xff]
    %v102 = vld [vmem:[%s2 + $0x268] sm:$0xff]
    %v103 = vld [vmem:[%s2 + $0x270] sm:$0xff]
    %v104 = vld [vmem:[%s2 + $0x278] sm:$0xff]
    %v105 = vld [vmem:[%s2 + $0x280] sm:$0xff]
    %v106 = vld [vmem:[%s2 + $0x288] sm:$0xff]
    %v107 = vld [vmem:[%s2 + $0x290] sm:$0xff]
    %v108 = vld [vmem:[%s2 + $0x298] sm:$0xff]
    %v109 = vld [vmem:[%s2 + $0x2a0] sm:$0xff]
    %v110 = vld [vmem:[%s2 + $0x2a8] sm:$0xff]
    %v111 = vld [vmem:[%s2 + $0x2b0] sm:$0xff]
    %v112 = vld [vmem:[%s2 + $0x2b8] sm:$0xff]
    %v113 = vld [vmem:[%s2 + $0x2c0] sm:$0xff]
    %v114 = vld [vmem:[%s2 + $0x2c8] sm:$0xff]
    %v115 = vld [vmem:[%s2 + $0x2d0] sm:$0xff]
    %v116 = vld [vmem:[%s2 + $0x2d8] sm:$0xff]
    %v117 = vld [vmem:[%s2 + $0x2e0] sm:$0xff]
    %v118 = vld [vmem:[%s2 + $0x2e8] sm:$0xff]
    %v119 = vld [vmem:[%s2 + $0x2f0] sm:$0xff]
    %v120 = vld [vmem:[%s2 + $0x2f8] sm:$0xff]
    %v121 = vld [vmem:[%s3] sm:$0xff]
    %v122 = vld [vmem:[%s3 + $0x8] sm:$0xff]
    %v123 = vld [vmem:[%s3 + $0x10] sm:$0xff]
    %v124 = vld [vmem:[%s3 + $0x18] sm:$0xff]
    %v125 = vld [vmem:[%s3 + $0x20] sm:$0xff]
    %v126 = vld [vmem:[%s3 + $0x28] sm:$0xff]
    %v127 = vld [vmem:[%s3 + $0x30] sm:$0xff]
    %v128 = vld [vmem:[%s3 + $0x38] sm:$0xff]
    %v129 = vld [vmem:[%s3 + $0x40] sm:$0xff]
    %v130 = vld [vmem:[%s3 + $0x48] sm:$0xff]
    %v131 = vld [vmem:[%s3 + $0x50] sm:$0xff]
    %v132 = vld [vmem:[%s3 + $0x58] sm:$0xff]
    %v133 = vld [vmem:[%s3 + $0x60] sm:$0xff]
    %v134 = vld [vmem:[%s3 + $0x68] sm:$0xff]
    %v135 = vld [vmem:[%s3 + $0x70] sm:$0xff]
    %v136 = vld [vmem:[%s3 + $0x78] sm:$0xff]
    %v137 = vld [vmem:[%s3 + $0x80] sm:$0xff]
    %v138 = vld [vmem:[%s3 + $0x88] sm:$0xff]
    %v139 = vld [vmem:[%s3 + $0x90] sm:$0xff]
    %v140 = vld [vmem:[%s3 + $0x98] sm:$0xff]
    %v141 = vld [vmem:[%s3 + $0xa0] sm:$0xff]
    %v142 = vld [vmem:[%s3 + $0xa8] sm:$0xff]
    %v143 = vld [vmem:[%s3 + $0xb0] sm:$0xff]
    %v144 = vld [vmem:[%s3 + $0xb8] sm:$0xff]
    %v145 = vld [vmem:[%s3 + $0xc0] sm:$0xff]
    %v146 = vld [vmem:[%s3 + $0xc8] sm:$0xff]
    %v147 = vld [vmem:[%s3 + $0xd0] sm:$0xff]
    %v148 = vld [vmem:[%s3 + $0xd8] sm:$0xff]
    %v149 = vld [vmem:[%s3 + $0xe0] sm:$0xff]
    %v150 = vld [vmem:[%s3 + $0xe8] sm:$0xff]
    %v151 = vld [vmem:[%s3 + $0xf0] sm:$0xff]
    %v152 = vld [vmem:[%s3 + $0xf8] sm:$0xff]
    %v153 = vld [vmem:[%s3 + $0x100] sm:$0xff]
    %v154 = vld [vmem:[%s3 + $0x108] sm:$0xff]
    %v155 = vld [vmem:[%s3 + $0x110] sm:$0xff]
    %v156 = vld [vmem:[%s3 + $0x118] sm:$0xff]
    %v157 = vld [vmem:[%s3 + $0x120] sm:$0xff]
    %v158 = vld [vmem:[%s3 + $0x128] sm:$0xff]
    %v159 = vld [vmem:[%s3 + $0x130] sm:$0xff]
    %v160 = vld [vmem:[%s3 + $0x138] sm:$0xff]
    %v161 = vld [vmem:[%s3 + $0x140] sm:$0xff]
    %v162 = vld [vmem:[%s3 + $0x148] sm:$0xff]
    %v163 = vld [vmem:[%s3 + $0x150] sm:$0xff]
    %v164 = vld [vmem:[%s3 + $0x158] sm:$0xff]
    %v165 = vld [vmem:[%s3 + $0x160] sm:$0xff]
    %v166 = vld [vmem:[%s3 + $0x168] sm:$0xff]
    %v167 = vld [vmem:[%s3 + $0x170] sm:$0xff]
    %v168 = vld [vmem:[%s3 + $0x178] sm:$0xff]
    %v169 = vld [vmem:[%s4] sm:$0xf]
    %v170 = vld [vmem:[%s5] sm:$0xf]
    %v171 = vld [vmem:[%s0] sm:$0xff]
    %v172 = vld [vmem:[%s0 + $0x8] sm:$0xf]
    %175 = vst [vmem:[#allocation1] ss:$4 sm:$0xff] %v171
    %s176 = scalar_lea.vmem [#allocation1], 32
    %177 = vst [vmem:[%s176] ss:$4 sm:$0xff] %v172
    %v178 = vld.sshfl [vmem:[#allocation1] sm:$0xff pattern:$0x73625140]
    %v179 = vld.sshfl [vmem:[#allocation1 + $0x8] sm:$0xff pattern:$0x73625140]
    %v180 = vld.sshfl [vmem:[#allocation1 + $0x10] sm:$0xff pattern:$0x73625140]
    %v181 = vld.sshfl [vmem:[#allocation1 + $0x18] sm:$0xff pattern:$0x73625140]
    %v182 = vld.sshfl [vmem:[#allocation1 + $0x20] sm:$0xff pattern:$0x73625140]
    %v183 = vld.sshfl [vmem:[#allocation1 + $0x28] sm:$0xff pattern:$0x73625140]
    %v190 = vpack.c.bf16 %v178, %v178
    %v191 = vpack.c.bf16 %v179, %v179
    %v192 = vpack.c.bf16 %v180, %v180
    %v193 = vpack.c.bf16 %v181, %v181
    %v194 = vpack.c.bf16 %v182, %v182
    %v195 = vpack.c.bf16 %v183, %v183
    %v292 = vunpack.c.l.b16 %v25
    %v293 = vunpack.c.h.b16 %v25
    %v294 = vunpack.c.l.b16 %v26
    %v295 = vunpack.c.h.b16 %v26
    %v296 = vunpack.c.l.b16 %v27
    %v297 = vunpack.c.h.b16 %v27
    %v298 = vunpack.c.l.b16 %v28
    %v299 = vunpack.c.h.b16 %v28
    %v300 = vunpack.c.l.b16 %v29
    %v301 = vunpack.c.h.b16 %v29
    %v302 = vunpack.c.l.b16 %v30
    %v303 = vunpack.c.h.b16 %v30
    %v304 = vunpack.c.l.b16 %v31
    %v305 = vunpack.c.h.b16 %v31
    %v306 = vunpack.c.l.b16 %v32
    %v307 = vunpack.c.h.b16 %v32
    %v308 = vunpack.c.l.b16 %v33
    %v309 = vunpack.c.h.b16 %v33
    %v310 = vunpack.c.l.b16 %v34
    %v311 = vunpack.c.h.b16 %v34
    %v312 = vunpack.c.l.b16 %v35
    %v313 = vunpack.c.h.b16 %v35
    %v314 = vunpack.c.l.b16 %v36
    %v315 = vunpack.c.h.b16 %v36
    %v316 = vunpack.c.l.b16 %v37
    %v317 = vunpack.c.h.b16 %v37
    %v318 = vunpack.c.l.b16 %v38
    %v319 = vunpack.c.h.b16 %v38
    %v320 = vunpack.c.l.b16 %v39
    %v321 = vunpack.c.h.b16 %v39
    %v322 = vunpack.c.l.b16 %v40
    %v323 = vunpack.c.h.b16 %v40
    %v324 = vunpack.c.l.b16 %v41
    %v325 = vunpack.c.h.b16 %v41
    %v326 = vunpack.c.l.b16 %v42
    %v327 = vunpack.c.h.b16 %v42
    %v328 = vunpack.c.l.b16 %v43
    %v329 = vunpack.c.h.b16 %v43
    %v330 = vunpack.c.l.b16 %v44
    %v331 = vunpack.c.h.b16 %v44
    %v332 = vunpack.c.l.b16 %v45
    %v333 = vunpack.c.h.b16 %v45
    %v334 = vunpack.c.l.b16 %v46
    %v335 = vunpack.c.h.b16 %v46
    %v336 = vunpack.c.l.b16 %v47
    %v337 = vunpack.c.h.b16 %v47
    %v338 = vunpack.c.l.b16 %v48
    %v339 = vunpack.c.h.b16 %v48
    %v340 = vunpack.c.l.b16 %v49
    %v341 = vunpack.c.h.b16 %v49
    %v342 = vunpack.c.l.b16 %v50
    %v343 = vunpack.c.h.b16 %v50
    %v344 = vunpack.c.l.b16 %v51
    %v345 = vunpack.c.h.b16 %v51
    %v346 = vunpack.c.l.b16 %v52
    %v347 = vunpack.c.h.b16 %v52
    %v348 = vunpack.c.l.b16 %v53
    %v349 = vunpack.c.h.b16 %v53
    %v350 = vunpack.c.l.b16 %v54
    %v351 = vunpack.c.h.b16 %v54
    %v352 = vunpack.c.l.b16 %v55
    %v353 = vunpack.c.h.b16 %v55
    %v354 = vunpack.c.l.b16 %v56
    %v355 = vunpack.c.h.b16 %v56
    %v356 = vunpack.c.l.b16 %v57
    %v357 = vunpack.c.h.b16 %v57
    %v358 = vunpack.c.l.b16 %v58
    %v359 = vunpack.c.h.b16 %v58
    %v360 = vunpack.c.l.b16 %v59
    %v361 = vunpack.c.h.b16 %v59
    %v362 = vunpack.c.l.b16 %v60
    %v363 = vunpack.c.h.b16 %v60
    %v364 = vunpack.c.l.b16 %v61
    %v365 = vunpack.c.h.b16 %v61
    %v366 = vunpack.c.l.b16 %v62
    %v367 = vunpack.c.h.b16 %v62
    %v368 = vunpack.c.l.b16 %v63
    %v369 = vunpack.c.h.b16 %v63
    %v370 = vunpack.c.l.b16 %v64
    %v371 = vunpack.c.h.b16 %v64
    %v372 = vunpack.c.l.b16 %v65
    %v373 = vunpack.c.h.b16 %v65
    %v374 = vunpack.c.l.b16 %v66
    %v375 = vunpack.c.h.b16 %v66
    %v376 = vunpack.c.l.b16 %v67
    %v377 = vunpack.c.h.b16 %v67
    %v378 = vunpack.c.l.b16 %v68
    %v379 = vunpack.c.h.b16 %v68
    %v380 = vunpack.c.l.b16 %v69
    %v381 = vunpack.c.h.b16 %v69
    %v382 = vunpack.c.l.b16 %v70
    %v383 = vunpack.c.h.b16 %v70
    %v384 = vunpack.c.l.b16 %v71
    %v385 = vunpack.c.h.b16 %v71
    %v386 = vunpack.c.l.b16 %v72
    %v387 = vunpack.c.h.b16 %v72
    %v388 = vunpack.c.l.b16 %v73
    %v389 = vunpack.c.h.b16 %v73
    %v390 = vunpack.c.l.b16 %v74
    %v391 = vunpack.c.h.b16 %v74
    %v392 = vunpack.c.l.b16 %v75
    %v393 = vunpack.c.h.b16 %v75
    %v394 = vunpack.c.l.b16 %v76
    %v395 = vunpack.c.h.b16 %v76
    %v396 = vunpack.c.l.b16 %v77
    %v397 = vunpack.c.h.b16 %v77
    %v398 = vunpack.c.l.b16 %v78
    %v399 = vunpack.c.h.b16 %v78
    %v400 = vunpack.c.l.b16 %v79
    %v401 = vunpack.c.h.b16 %v79
    %v402 = vunpack.c.l.b16 %v80
    %v403 = vunpack.c.h.b16 %v80
    %v404 = vunpack.c.l.b16 %v81
    %v405 = vunpack.c.h.b16 %v81
    %v406 = vunpack.c.l.b16 %v82
    %v407 = vunpack.c.h.b16 %v82
    %v408 = vunpack.c.l.b16 %v83
    %v409 = vunpack.c.h.b16 %v83
    %v410 = vunpack.c.l.b16 %v84
    %v411 = vunpack.c.h.b16 %v84
    %v412 = vunpack.c.l.b16 %v85
    %v413 = vunpack.c.h.b16 %v85
    %v414 = vunpack.c.l.b16 %v86
    %v415 = vunpack.c.h.b16 %v86
    %v416 = vunpack.c.l.b16 %v87
    %v417 = vunpack.c.h.b16 %v87
    %v418 = vunpack.c.l.b16 %v88
    %v419 = vunpack.c.h.b16 %v88
    %v420 = vunpack.c.l.b16 %v89
    %v421 = vunpack.c.h.b16 %v89
    %v422 = vunpack.c.l.b16 %v90
    %v423 = vunpack.c.h.b16 %v90
    %v424 = vunpack.c.l.b16 %v91
    %v425 = vunpack.c.h.b16 %v91
    %v426 = vunpack.c.l.b16 %v92
    %v427 = vunpack.c.h.b16 %v92
    %v428 = vunpack.c.l.b16 %v93
    %v429 = vunpack.c.h.b16 %v93
    %v430 = vunpack.c.l.b16 %v94
    %v431 = vunpack.c.h.b16 %v94
    %v432 = vunpack.c.l.b16 %v95
    %v433 = vunpack.c.h.b16 %v95
    %v434 = vunpack.c.l.b16 %v96
    %v435 = vunpack.c.h.b16 %v96
    %v436 = vunpack.c.l.b16 %v97
    %v437 = vunpack.c.h.b16 %v97
    %v438 = vunpack.c.l.b16 %v98
    %v439 = vunpack.c.h.b16 %v98
    %v440 = vunpack.c.l.b16 %v99
    %v441 = vunpack.c.h.b16 %v99
    %v442 = vunpack.c.l.b16 %v100
    %v443 = vunpack.c.h.b16 %v100
    %v444 = vunpack.c.l.b16 %v101
    %v445 = vunpack.c.h.b16 %v101
    %v446 = vunpack.c.l.b16 %v102
    %v447 = vunpack.c.h.b16 %v102
    %v448 = vunpack.c.l.b16 %v103
    %v449 = vunpack.c.h.b16 %v103
    %v450 = vunpack.c.l.b16 %v104
    %v451 = vunpack.c.h.b16 %v104
    %v452 = vunpack.c.l.b16 %v105
    %v453 = vunpack.c.h.b16 %v105
    %v454 = vunpack.c.l.b16 %v106
    %v455 = vunpack.c.h.b16 %v106
    %v456 = vunpack.c.l.b16 %v107
    %v457 = vunpack.c.h.b16 %v107
    %v458 = vunpack.c.l.b16 %v108
    %v459 = vunpack.c.h.b16 %v108
    %v460 = vunpack.c.l.b16 %v109
    %v461 = vunpack.c.h.b16 %v109
    %v462 = vunpack.c.l.b16 %v110
    %v463 = vunpack.c.h.b16 %v110
    %v464 = vunpack.c.l.b16 %v111
    %v465 = vunpack.c.h.b16 %v111
    %v466 = vunpack.c.l.b16 %v112
    %v467 = vunpack.c.h.b16 %v112
    %v468 = vunpack.c.l.b16 %v113
    %v469 = vunpack.c.h.b16 %v113
    %v470 = vunpack.c.l.b16 %v114
    %v471 = vunpack.c.h.b16 %v114
    %v472 = vunpack.c.l.b16 %v115
    %v473 = vunpack.c.h.b16 %v115
    %v474 = vunpack.c.l.b16 %v116
    %v475 = vunpack.c.h.b16 %v116
    %v476 = vunpack.c.l.b16 %v117
    %v477 = vunpack.c.h.b16 %v117
    %v478 = vunpack.c.l.b16 %v118
    %v479 = vunpack.c.h.b16 %v118
    %v480 = vunpack.c.l.b16 %v119
    %v481 = vunpack.c.h.b16 %v119
    %v482 = vunpack.c.l.b16 %v120
    %v483 = vunpack.c.h.b16 %v120
    %v484 = vpack.c.b16 %v294, %v292
    %v485 = vpack.c.b16 %v295, %v293
    %v486 = vpack.c.b16 %v298, %v296
    %v487 = vpack.c.b16 %v299, %v297
    %v488 = vpack.c.b16 %v302, %v300
    %v489 = vpack.c.b16 %v303, %v301
    %v490 = vpack.c.b16 %v306, %v304
    %v491 = vpack.c.b16 %v307, %v305
    %v492 = vpack.c.b16 %v310, %v308
    %v493 = vpack.c.b16 %v311, %v309
    %v494 = vpack.c.b16 %v314, %v312
    %v495 = vpack.c.b16 %v315, %v313
    %v496 = vpack.c.b16 %v318, %v316
    %v497 = vpack.c.b16 %v319, %v317
    %v498 = vpack.c.b16 %v322, %v320
    %v499 = vpack.c.b16 %v323, %v321
    %v500 = vpack.c.b16 %v326, %v324
    %v501 = vpack.c.b16 %v327, %v325
    %v502 = vpack.c.b16 %v330, %v328
    %v503 = vpack.c.b16 %v331, %v329
    %v504 = vpack.c.b16 %v334, %v332
    %v505 = vpack.c.b16 %v335, %v333
    %v506 = vpack.c.b16 %v338, %v336
    %v507 = vpack.c.b16 %v339, %v337
    %v508 = vpack.c.b16 %v342, %v340
    %v509 = vpack.c.b16 %v343, %v341
    %v510 = vpack.c.b16 %v346, %v344
    %v511 = vpack.c.b16 %v347, %v345
    %v512 = vpack.c.b16 %v350, %v348
    %v513 = vpack.c.b16 %v351, %v349
    %v514 = vpack.c.b16 %v354, %v352
    %v515 = vpack.c.b16 %v355, %v353
    %v516 = vpack.c.b16 %v358, %v356
    %v517 = vpack.c.b16 %v359, %v357
    %v518 = vpack.c.b16 %v362, %v360
    %v519 = vpack.c.b16 %v363, %v361
    %v520 = vpack.c.b16 %v366, %v364
    %v521 = vpack.c.b16 %v367, %v365
    %v522 = vpack.c.b16 %v370, %v368
    %v523 = vpack.c.b16 %v371, %v369
    %v524 = vpack.c.b16 %v374, %v372
    %v525 = vpack.c.b16 %v375, %v373
    %v526 = vpack.c.b16 %v378, %v376
    %v527 = vpack.c.b16 %v379, %v377
    %v528 = vpack.c.b16 %v382, %v380
    %v529 = vpack.c.b16 %v383, %v381
    %v530 = vpack.c.b16 %v386, %v384
    %v531 = vpack.c.b16 %v387, %v385
    %v532 = vpack.c.b16 %v390, %v388
    %v533 = vpack.c.b16 %v391, %v389
    %v534 = vpack.c.b16 %v394, %v392
    %v535 = vpack.c.b16 %v395, %v393
    %v536 = vpack.c.b16 %v398, %v396
    %v537 = vpack.c.b16 %v399, %v397
    %v538 = vpack.c.b16 %v402, %v400
    %v539 = vpack.c.b16 %v403, %v401
    %v540 = vpack.c.b16 %v406, %v404
    %v541 = vpack.c.b16 %v407, %v405
    %v542 = vpack.c.b16 %v410, %v408
    %v543 = vpack.c.b16 %v411, %v409
    %v544 = vpack.c.b16 %v414, %v412
    %v545 = vpack.c.b16 %v415, %v413
    %v546 = vpack.c.b16 %v418, %v416
    %v547 = vpack.c.b16 %v419, %v417
    %v548 = vpack.c.b16 %v422, %v420
    %v549 = vpack.c.b16 %v423, %v421
    %v550 = vpack.c.b16 %v426, %v424
    %v551 = vpack.c.b16 %v427, %v425
    %v552 = vpack.c.b16 %v430, %v428
    %v553 = vpack.c.b16 %v431, %v429
    %v554 = vpack.c.b16 %v434, %v432
    %v555 = vpack.c.b16 %v435, %v433
    %v556 = vpack.c.b16 %v438, %v436
    %v557 = vpack.c.b16 %v439, %v437
    %v558 = vpack.c.b16 %v442, %v440
    %v559 = vpack.c.b16 %v443, %v441
    %v560 = vpack.c.b16 %v446, %v444
    %v561 = vpack.c.b16 %v447, %v445
    %v562 = vpack.c.b16 %v450, %v448
    %v563 = vpack.c.b16 %v451, %v449
    %v564 = vpack.c.b16 %v454, %v452
    %v565 = vpack.c.b16 %v455, %v453
    %v566 = vpack.c.b16 %v458, %v456
    %v567 = vpack.c.b16 %v459, %v457
    %v568 = vpack.c.b16 %v462, %v460
    %v569 = vpack.c.b16 %v463, %v461
    %v570 = vpack.c.b16 %v466, %v464
    %v571 = vpack.c.b16 %v467, %v465
    %v572 = vpack.c.b16 %v470, %v468
    %v573 = vpack.c.b16 %v471, %v469
    %v574 = vpack.c.b16 %v474, %v472
    %v575 = vpack.c.b16 %v475, %v473
    %v576 = vpack.c.b16 %v478, %v476
    %v577 = vpack.c.b16 %v479, %v477
    %v578 = vpack.c.b16 %v482, %v480
    %v579 = vpack.c.b16 %v483, %v481
    %676 = vmatpush.bf16.msra.mxu0 %v498
    %677 = vmatpush.bf16.msra.mxu0 %v496
    %678 = vmatpush.bf16.msra.mxu0 %v494
    %679 = vmatpush.bf16.msra.mxu0 %v492
    %680 = vmatpush.bf16.msra.mxu0 %v490
    %681 = vmatpush.bf16.msra.mxu0 %v488
    %682 = vmatpush.bf16.msra.mxu0 %v486
    %683 = vmatpush.bf16.msra.mxu0 %v484
    %684 = vmatmul.bf16.gmra.mxu0 %v190
    %v685 = vpop.f32.mrf.mxu0
    %v686 = vadd.f32 0.0, %v685
    %v687 = vpop.f32.mrf.mxu0
    %688 = vdwg.mxu0
    %689 = vmatpush.bf16.msra.mxu0 %v514
    %690 = vmatpush.bf16.msra.mxu0 %v512
    %691 = vmatpush.bf16.msra.mxu0 %v510
    %692 = vmatpush.bf16.msra.mxu0 %v508
    %693 = vmatpush.bf16.msra.mxu0 %v506
    %694 = vmatpush.bf16.msra.mxu0 %v504
    %695 = vmatpush.bf16.msra.mxu0 %v502
    %696 = vmatpush.bf16.msra.mxu0 %v500
    %697 = vmatmul.bf16.gmra.mxu0 %v191
    %v698 = vpop.f32.mrf.mxu0
    %v699 = vadd.f32 %v686, %v698
    %v700 = vpop.f32.mrf.mxu0
    %701 = vdwg.mxu0
    %702 = vmatpush.bf16.msra.mxu0 %v530
    %703 = vmatpush.bf16.msra.mxu0 %v528
    %704 = vmatpush.bf16.msra.mxu0 %v526
    %705 = vmatpush.bf16.msra.mxu0 %v524
    %706 = vmatpush.bf16.msra.mxu0 %v522
    %707 = vmatpush.bf16.msra.mxu0 %v520
    %708 = vmatpush.bf16.msra.mxu0 %v518
    %709 = vmatpush.bf16.msra.mxu0 %v516
    %710 = vmatmul.bf16.gmra.mxu0 %v192
    %v711 = vpop.f32.mrf.mxu0
    %v712 = vadd.f32 %v699, %v711
    %v713 = vpop.f32.mrf.mxu0
    %714 = vdwg.mxu0
    %715 = vmatpush.bf16.msra.mxu0 %v546
    %716 = vmatpush.bf16.msra.mxu0 %v544
    %717 = vmatpush.bf16.msra.mxu0 %v542
    %718 = vmatpush.bf16.msra.mxu0 %v540
    %719 = vmatpush.bf16.msra.mxu0 %v538
    %720 = vmatpush.bf16.msra.mxu0 %v536
    %721 = vmatpush.bf16.msra.mxu0 %v534
    %722 = vmatpush.bf16.msra.mxu0 %v532
    %723 = vmatmul.bf16.gmra.mxu0 %v193
    %v724 = vpop.f32.mrf.mxu0
    %v725 = vadd.f32 %v712, %v724
    %v726 = vpop.f32.mrf.mxu0
    %727 = vdwg.mxu0
    %728 = vmatpush.bf16.msra.mxu0 %v562
    %729 = vmatpush.bf16.msra.mxu0 %v560
    %730 = vmatpush.bf16.msra.mxu0 %v558
    %731 = vmatpush.bf16.msra.mxu0 %v556
    %732 = vmatpush.bf16.msra.mxu0 %v554
    %733 = vmatpush.bf16.msra.mxu0 %v552
    %734 = vmatpush.bf16.msra.mxu0 %v550
    %735 = vmatpush.bf16.msra.mxu0 %v548
    %736 = vmatmul.bf16.gmra.mxu0 %v194
    %v737 = vpop.f32.mrf.mxu0
    %v738 = vadd.f32 %v725, %v737
    %v739 = vpop.f32.mrf.mxu0
    %740 = vdwg.mxu0
    %741 = vmatpush.bf16.msra.mxu0 %v578
    %742 = vmatpush.bf16.msra.mxu0 %v576
    %743 = vmatpush.bf16.msra.mxu0 %v574
    %744 = vmatpush.bf16.msra.mxu0 %v572
    %745 = vmatpush.bf16.msra.mxu0 %v570
    %746 = vmatpush.bf16.msra.mxu0 %v568
    %747 = vmatpush.bf16.msra.mxu0 %v566
    %748 = vmatpush.bf16.msra.mxu0 %v564
    %749 = vmatmul.bf16.gmra.mxu0 %v195
    %v750 = vpop.f32.mrf.mxu0
    %v751 = vadd.f32 %v738, %v750
    %v752 = vpop.f32.mrf.mxu0
    %753 = vdwg.mxu0
    %754 = vmatpush.bf16.msra.mxu0 %v499
    %755 = vmatpush.bf16.msra.mxu0 %v497
    %756 = vmatpush.bf16.msra.mxu0 %v495
    %757 = vmatpush.bf16.msra.mxu0 %v493
    %758 = vmatpush.bf16.msra.mxu0 %v491
    %759 = vmatpush.bf16.msra.mxu0 %v489
    %760 = vmatpush.bf16.msra.mxu0 %v487
    %761 = vmatpush.bf16.msra.mxu0 %v485
    %762 = vmatmul.bf16.gmra.mxu0 %v190
    %v763 = vpop.f32.mrf.mxu0
    %v764 = vadd.f32 0.0, %v763
    %v765 = vpop.f32.mrf.mxu0
    %766 = vdwg.mxu0
    %767 = vmatpush.bf16.msra.mxu0 %v515
    %768 = vmatpush.bf16.msra.mxu0 %v513
    %769 = vmatpush.bf16.msra.mxu0 %v511
    %770 = vmatpush.bf16.msra.mxu0 %v509
    %771 = vmatpush.bf16.msra.mxu0 %v507
    %772 = vmatpush.bf16.msra.mxu0 %v505
    %773 = vmatpush.bf16.msra.mxu0 %v503
    %774 = vmatpush.bf16.msra.mxu0 %v501
    %775 = vmatmul.bf16.gmra.mxu0 %v191
    %v776 = vpop.f32.mrf.mxu0
    %v777 = vadd.f32 %v764, %v776
    %v778 = vpop.f32.mrf.mxu0
    %779 = vdwg.mxu0
    %780 = vmatpush.bf16.msra.mxu0 %v531
    %781 = vmatpush.bf16.msra.mxu0 %v529
    %782 = vmatpush.bf16.msra.mxu0 %v527
    %783 = vmatpush.bf16.msra.mxu0 %v525
    %784 = vmatpush.bf16.msra.mxu0 %v523
    %785 = vmatpush.bf16.msra.mxu0 %v521
    %786 = vmatpush.bf16.msra.mxu0 %v519
    %787 = vmatpush.bf16.msra.mxu0 %v517
    %788 = vmatmul.bf16.gmra.mxu0 %v192
    %v789 = vpop.f32.mrf.mxu0
    %v790 = vadd.f32 %v777, %v789
    %v791 = vpop.f32.mrf.mxu0
    %792 = vdwg.mxu0
    %793 = vmatpush.bf16.msra.mxu0 %v547
    %794 = vmatpush.bf16.msra.mxu0 %v545
    %795 = vmatpush.bf16.msra.mxu0 %v543
    %796 = vmatpush.bf16.msra.mxu0 %v541
    %797 = vmatpush.bf16.msra.mxu0 %v539
    %798 = vmatpush.bf16.msra.mxu0 %v537
    %799 = vmatpush.bf16.msra.mxu0 %v535
    %800 = vmatpush.bf16.msra.mxu0 %v533
    %801 = vmatmul.bf16.gmra.mxu0 %v193
    %v802 = vpop.f32.mrf.mxu0
    %v803 = vadd.f32 %v790, %v802
    %v804 = vpop.f32.mrf.mxu0
    %805 = vdwg.mxu0
    %806 = vmatpush.bf16.msra.mxu0 %v563
    %807 = vmatpush.bf16.msra.mxu0 %v561
    %808 = vmatpush.bf16.msra.mxu0 %v559
    %809 = vmatpush.bf16.msra.mxu0 %v557
    %810 = vmatpush.bf16.msra.mxu0 %v555
    %811 = vmatpush.bf16.msra.mxu0 %v553
    %812 = vmatpush.bf16.msra.mxu0 %v551
    %813 = vmatpush.bf16.msra.mxu0 %v549
    %814 = vmatmul.bf16.gmra.mxu0 %v194
    %v815 = vpop.f32.mrf.mxu0
    %v816 = vadd.f32 %v803, %v815
    %v817 = vpop.f32.mrf.mxu0
    %818 = vdwg.mxu0
    %819 = vmatpush.bf16.msra.mxu0 %v579
    %820 = vmatpush.bf16.msra.mxu0 %v577
    %821 = vmatpush.bf16.msra.mxu0 %v575
    %822 = vmatpush.bf16.msra.mxu0 %v573
    %823 = vmatpush.bf16.msra.mxu0 %v571
    %824 = vmatpush.bf16.msra.mxu0 %v569
    %825 = vmatpush.bf16.msra.mxu0 %v567
    %826 = vmatpush.bf16.msra.mxu0 %v565
    %827 = vmatmul.bf16.gmra.mxu0 %v195
    %v828 = vpop.f32.mrf.mxu0
    %v829 = vadd.f32 %v816, %v828
    %v830 = vpop.f32.mrf.mxu0
    %831 = vdwg.mxu0
    %v832 = vpack.c.bf16 %v751, %v751
    %v833 = vpack.c.bf16 %v829, %v829
    %v882 = vunpack.c.l.b16 %v121
    %v883 = vunpack.c.h.b16 %v121
    %v884 = vunpack.c.l.b16 %v122
    %v885 = vunpack.c.h.b16 %v122
    %v886 = vunpack.c.l.b16 %v123
    %v887 = vunpack.c.h.b16 %v123
    %v888 = vunpack.c.l.b16 %v124
    %v889 = vunpack.c.h.b16 %v124
    %v890 = vunpack.c.l.b16 %v125
    %v891 = vunpack.c.h.b16 %v125
    %v892 = vunpack.c.l.b16 %v126
    %v893 = vunpack.c.h.b16 %v126
    %v894 = vunpack.c.l.b16 %v127
    %v895 = vunpack.c.h.b16 %v127
    %v896 = vunpack.c.l.b16 %v128
    %v897 = vunpack.c.h.b16 %v128
    %v898 = vunpack.c.l.b16 %v129
    %v899 = vunpack.c.h.b16 %v129
    %v900 = vunpack.c.l.b16 %v130
    %v901 = vunpack.c.h.b16 %v130
    %v902 = vunpack.c.l.b16 %v131
    %v903 = vunpack.c.h.b16 %v131
    %v904 = vunpack.c.l.b16 %v132
    %v905 = vunpack.c.h.b16 %v132
    %v906 = vunpack.c.l.b16 %v133
    %v907 = vunpack.c.h.b16 %v133
    %v908 = vunpack.c.l.b16 %v134
    %v909 = vunpack.c.h.b16 %v134
    %v910 = vunpack.c.l.b16 %v135
    %v911 = vunpack.c.h.b16 %v135
    %v912 = vunpack.c.l.b16 %v136
    %v913 = vunpack.c.h.b16 %v136
    %v914 = vunpack.c.l.b16 %v137
    %v915 = vunpack.c.h.b16 %v137
    %v916 = vunpack.c.l.b16 %v138
    %v917 = vunpack.c.h.b16 %v138
    %v918 = vunpack.c.l.b16 %v139
    %v919 = vunpack.c.h.b16 %v139
    %v920 = vunpack.c.l.b16 %v140
    %v921 = vunpack.c.h.b16 %v140
    %v922 = vunpack.c.l.b16 %v141
    %v923 = vunpack.c.h.b16 %v141
    %v924 = vunpack.c.l.b16 %v142
    %v925 = vunpack.c.h.b16 %v142
    %v926 = vunpack.c.l.b16 %v143
    %v927 = vunpack.c.h.b16 %v143
    %v928 = vunpack.c.l.b16 %v144
    %v929 = vunpack.c.h.b16 %v144
    %v930 = vunpack.c.l.b16 %v145
    %v931 = vunpack.c.h.b16 %v145
    %v932 = vunpack.c.l.b16 %v146
    %v933 = vunpack.c.h.b16 %v146
    %v934 = vunpack.c.l.b16 %v147
    %v935 = vunpack.c.h.b16 %v147
    %v936 = vunpack.c.l.b16 %v148
    %v937 = vunpack.c.h.b16 %v148
    %v938 = vunpack.c.l.b16 %v149
    %v939 = vunpack.c.h.b16 %v149
    %v940 = vunpack.c.l.b16 %v150
    %v941 = vunpack.c.h.b16 %v150
    %v942 = vunpack.c.l.b16 %v151
    %v943 = vunpack.c.h.b16 %v151
    %v944 = vunpack.c.l.b16 %v152
    %v945 = vunpack.c.h.b16 %v152
    %v946 = vunpack.c.l.b16 %v153
    %v947 = vunpack.c.h.b16 %v153
    %v948 = vunpack.c.l.b16 %v154
    %v949 = vunpack.c.h.b16 %v154
    %v950 = vunpack.c.l.b16 %v155
    %v951 = vunpack.c.h.b16 %v155
    %v952 = vunpack.c.l.b16 %v156
    %v953 = vunpack.c.h.b16 %v156
    %v954 = vunpack.c.l.b16 %v157
    %v955 = vunpack.c.h.b16 %v157
    %v956 = vunpack.c.l.b16 %v158
    %v957 = vunpack.c.h.b16 %v158
    %v958 = vunpack.c.l.b16 %v159
    %v959 = vunpack.c.h.b16 %v159
    %v960 = vunpack.c.l.b16 %v160
    %v961 = vunpack.c.h.b16 %v160
    %v962 = vunpack.c.l.b16 %v161
    %v963 = vunpack.c.h.b16 %v161
    %v964 = vunpack.c.l.b16 %v162
    %v965 = vunpack.c.h.b16 %v162
    %v966 = vunpack.c.l.b16 %v163
    %v967 = vunpack.c.h.b16 %v163
    %v968 = vunpack.c.l.b16 %v164
    %v969 = vunpack.c.h.b16 %v164
    %v970 = vunpack.c.l.b16 %v165
    %v971 = vunpack.c.h.b16 %v165
    %v972 = vunpack.c.l.b16 %v166
    %v973 = vunpack.c.h.b16 %v166
    %v974 = vunpack.c.l.b16 %v167
    %v975 = vunpack.c.h.b16 %v167
    %v976 = vunpack.c.l.b16 %v168
    %v977 = vunpack.c.h.b16 %v168
    %v978 = vpack.c.b16 %v886, %v882
    %v979 = vpack.c.b16 %v887, %v883
    %v980 = vpack.c.b16 %v888, %v884
    %v981 = vpack.c.b16 %v889, %v885
    %v982 = vpack.c.b16 %v894, %v890
    %v983 = vpack.c.b16 %v895, %v891
    %v984 = vpack.c.b16 %v896, %v892
    %v985 = vpack.c.b16 %v897, %v893
    %v986 = vpack.c.b16 %v902, %v898
    %v987 = vpack.c.b16 %v903, %v899
    %v988 = vpack.c.b16 %v904, %v900
    %v989 = vpack.c.b16 %v905, %v901
    %v990 = vpack.c.b16 %v910, %v906
    %v991 = vpack.c.b16 %v911, %v907
    %v992 = vpack.c.b16 %v912, %v908
    %v993 = vpack.c.b16 %v913, %v909
    %v994 = vpack.c.b16 %v918, %v914
    %v995 = vpack.c.b16 %v919, %v915
    %v996 = vpack.c.b16 %v920, %v916
    %v997 = vpack.c.b16 %v921, %v917
    %v998 = vpack.c.b16 %v926, %v922
    %v999 = vpack.c.b16 %v927, %v923
    %v1000 = vpack.c.b16 %v928, %v924
    %v1001 = vpack.c.b16 %v929, %v925
    %v1002 = vpack.c.b16 %v934, %v930
    %v1003 = vpack.c.b16 %v935, %v931
    %v1004 = vpack.c.b16 %v936, %v932
    %v1005 = vpack.c.b16 %v937, %v933
    %v1006 = vpack.c.b16 %v942, %v938
    %v1007 = vpack.c.b16 %v943, %v939
    %v1008 = vpack.c.b16 %v944, %v940
    %v1009 = vpack.c.b16 %v945, %v941
    %v1010 = vpack.c.b16 %v950, %v946
    %v1011 = vpack.c.b16 %v951, %v947
    %v1012 = vpack.c.b16 %v952, %v948
    %v1013 = vpack.c.b16 %v953, %v949
    %v1014 = vpack.c.b16 %v958, %v954
    %v1015 = vpack.c.b16 %v959, %v955
    %v1016 = vpack.c.b16 %v960, %v956
    %v1017 = vpack.c.b16 %v961, %v957
    %v1018 = vpack.c.b16 %v966, %v962
    %v1019 = vpack.c.b16 %v967, %v963
    %v1020 = vpack.c.b16 %v968, %v964
    %v1021 = vpack.c.b16 %v969, %v965
    %v1022 = vpack.c.b16 %v974, %v970
    %v1023 = vpack.c.b16 %v975, %v971
    %v1024 = vpack.c.b16 %v976, %v972
    %v1025 = vpack.c.b16 %v977, %v973
    %vm1074 = vcmask 523264
    %v1076 = vsel %vm1074, %v833, 0
    %1078 = vmatpush.bf16.msra.mxu0 %v1006
    %1079 = vmatpush.bf16.msra.mxu0 %v1002
    %1080 = vmatpush.bf16.msra.mxu0 %v998
    %1081 = vmatpush.bf16.msra.mxu0 %v994
    %1082 = vmatpush.bf16.msra.mxu0 %v990
    %1083 = vmatpush.bf16.msra.mxu0 %v986
    %1084 = vmatpush.bf16.msra.mxu0 %v982
    %1085 = vmatpush.bf16.msra.mxu0 %v978
    %1086 = vmatmul.bf16.gmra.mxu0 %v832
    %v1087 = vpop.f32.mrf.mxu0
    %v1088 = vadd.f32 0.0, %v1087
    %v1089 = vpop.f32.mrf.mxu0
    %1090 = vdwg.mxu0
    %1091 = vmatpush.bf16.msra.mxu0 0
    %1092 = vmatpush.bf16.msra.mxu0 0
    %1093 = vmatpush.bf16.msra.mxu0 0
    %1094 = vmatpush.bf16.msra.mxu0 0
    %1095 = vmatpush.bf16.msra.mxu0 %v1022
    %1096 = vmatpush.bf16.msra.mxu0 %v1018
    %1097 = vmatpush.bf16.msra.mxu0 %v1014
    %1098 = vmatpush.bf16.msra.mxu0 %v1010
    %1099 = vmatmul.bf16.gmra.mxu0 %v1076
    %v1100 = vpop.f32.mrf.mxu0
    %v1101 = vadd.f32 %v1088, %v1100
    %v1102 = vpop.f32.mrf.mxu0
    %1103 = vdwg.mxu0
    %1104 = vmatpush.bf16.msra.mxu0 %v1007
    %1105 = vmatpush.bf16.msra.mxu0 %v1003
    %1106 = vmatpush.bf16.msra.mxu0 %v999
    %1107 = vmatpush.bf16.msra.mxu0 %v995
    %1108 = vmatpush.bf16.msra.mxu0 %v991
    %1109 = vmatpush.bf16.msra.mxu0 %v987
    %1110 = vmatpush.bf16.msra.mxu0 %v983
    %1111 = vmatpush.bf16.msra.mxu0 %v979
    %1112 = vmatmul.bf16.gmra.mxu0 %v832
    %v1113 = vpop.f32.mrf.mxu0
    %v1114 = vadd.f32 0.0, %v1113
    %v1115 = vpop.f32.mrf.mxu0
    %1116 = vdwg.mxu0
    %1117 = vmatpush.bf16.msra.mxu0 0
    %1118 = vmatpush.bf16.msra.mxu0 0
    %1119 = vmatpush.bf16.msra.mxu0 0
    %1120 = vmatpush.bf16.msra.mxu0 0
    %1121 = vmatpush.bf16.msra.mxu0 %v1023
    %1122 = vmatpush.bf16.msra.mxu0 %v1019
    %1123 = vmatpush.bf16.msra.mxu0 %v1015
    %1124 = vmatpush.bf16.msra.mxu0 %v1011
    %1125 = vmatmul.bf16.gmra.mxu0 %v1076
    %v1126 = vpop.f32.mrf.mxu0
    %v1127 = vadd.f32 %v1114, %v1126
    %v1128 = vpop.f32.mrf.mxu0
    %1129 = vdwg.mxu0
    %1130 = vmatpush.bf16.msra.mxu0 %v1008
    %1131 = vmatpush.bf16.msra.mxu0 %v1004
    %1132 = vmatpush.bf16.msra.mxu0 %v1000
    %1133 = vmatpush.bf16.msra.mxu0 %v996
    %1134 = vmatpush.bf16.msra.mxu0 %v992
    %1135 = vmatpush.bf16.msra.mxu0 %v988
    %1136 = vmatpush.bf16.msra.mxu0 %v984
    %1137 = vmatpush.bf16.msra.mxu0 %v980
    %1138 = vmatmul.bf16.gmra.mxu0 %v832
    %v1139 = vpop.f32.mrf.mxu0
    %v1140 = vadd.f32 0.0, %v1139
    %v1141 = vpop.f32.mrf.mxu0
    %1142 = vdwg.mxu0
    %1143 = vmatpush.bf16.msra.mxu0 0
    %1144 = vmatpush.bf16.msra.mxu0 0
    %1145 = vmatpush.bf16.msra.mxu0 0
    %1146 = vmatpush.bf16.msra.mxu0 0
    %1147 = vmatpush.bf16.msra.mxu0 %v1024
    %1148 = vmatpush.bf16.msra.mxu0 %v1020
    %1149 = vmatpush.bf16.msra.mxu0 %v1016
    %1150 = vmatpush.bf16.msra.mxu0 %v1012
    %1151 = vmatmul.bf16.gmra.mxu0 %v1076
    %v1152 = vpop.f32.mrf.mxu0
    %v1153 = vadd.f32 %v1140, %v1152
    %v1154 = vpop.f32.mrf.mxu0
    %1155 = vdwg.mxu0
    %1156 = vmatpush.bf16.msra.mxu0 %v1009
    %1157 = vmatpush.bf16.msra.mxu0 %v1005
    %1158 = vmatpush.bf16.msra.mxu0 %v1001
    %1159 = vmatpush.bf16.msra.mxu0 %v997
    %1160 = vmatpush.bf16.msra.mxu0 %v993
    %1161 = vmatpush.bf16.msra.mxu0 %v989
    %1162 = vmatpush.bf16.msra.mxu0 %v985
    %1163 = vmatpush.bf16.msra.mxu0 %v981
    %1164 = vmatmul.bf16.gmra.mxu0 %v832
    %v1165 = vpop.f32.mrf.mxu0
    %v1166 = vadd.f32 0.0, %v1165
    %v1167 = vpop.f32.mrf.mxu0
    %1168 = vdwg.mxu0
    %1169 = vmatpush.bf16.msra.mxu0 0
    %1170 = vmatpush.bf16.msra.mxu0 0
    %1171 = vmatpush.bf16.msra.mxu0 0
    %1172 = vmatpush.bf16.msra.mxu0 0
    %1173 = vmatpush.bf16.msra.mxu0 %v1025
    %1174 = vmatpush.bf16.msra.mxu0 %v1021
    %1175 = vmatpush.bf16.msra.mxu0 %v1017
    %1176 = vmatpush.bf16.msra.mxu0 %v1013
    %1177 = vmatmul.bf16.gmra.mxu0 %v1076
    %v1178 = vpop.f32.mrf.mxu0
    %v1179 = vadd.f32 %v1166, %v1178
    %v1180 = vpop.f32.mrf.mxu0
    %1181 = vdwg.mxu0
    %v1183 = vperm.slane %v169, 0
    %v1184 = vperm.slane %v169, 1
    %v1185 = vperm.slane %v169, 2
    %v1186 = vperm.slane %v169, 3
    %v1191 = vmul.f32 %v1101, %v1183
    %v1192 = vmul.f32 %v1127, %v1184
    %v1193 = vmul.f32 %v1153, %v1185
    %v1194 = vmul.f32 %v1179, %v1186
    %v1196 = vperm.slane %v170, 0
    %v1197 = vperm.slane %v170, 1
    %v1198 = vperm.slane %v170, 2
    %v1199 = vperm.slane %v170, 3
    %v1204 = vadd.f32 %v1191, %v1196
    %v1205 = vadd.f32 %v1192, %v1197
    %v1206 = vadd.f32 %v1193, %v1198
    %v1207 = vadd.f32 %v1194, %v1199
    %v1208 = vmul.f32 %v1204, %v1204
    %v1209 = vmul.f32 %v1205, %v1205
    %v1210 = vmul.f32 %v1206, %v1206
    %v1211 = vmul.f32 %v1207, %v1207
    %vm1212 = vcmask 1041408
    %v1213 = vsel %vm1212, %v1208, 0.0
    %v1214 = vsel %vm1212, %v1209, 0.0
    %v1215 = vadd.f32 %v1213, %v1214
    %v1216 = vsel %vm1212, %v1210, 0.0
    %v1217 = vadd.f32 %v1215, %v1216
    %v1218 = vsel %vm1212, %v1211, 0.0
    %v1219 = vadd.f32 %v1217, %v1218
    %1220 = vadd.xlane.f32.xlu0 %v1219
    %v1221 = vpop.xlane.xlu0 %1220
    %v1222 = vadd.f32 %v1221, 1e-08
    %v1223 = vrsqrt.pop %v1222
    %v1224 = vmul.f32 %v1223, %v1222
    %v1225 = vmul.f32 %v1224, %v1223
    %v1226 = vmul.f32 0.5, %v1225
    %v1227 = vsub.f32 1.5, %v1226
    %v1228 = vmul.f32 %v1223, %v1227
    %vm1229 = vweird.f32 %v1222
    %vm1230 = vweird.f32 %v1223
    %vm1231 = vmor %vm1229, %vm1230
    %v1232 = vsel %vm1231, %v1223, %v1228
    %v1233 = vmul.f32 %v1204, %v1232
    %v1234 = vmul.f32 %v1205, %v1232
    %v1235 = vmul.f32 %v1206, %v1232
    %v1236 = vmul.f32 %v1207, %v1232
    %v1237 = vld [vmem:[%s1] sm:$0xff]
    %v1238 = vld [vmem:[%s1 + $0x8] sm:$0xf]
    %1241 = vst [vmem:[#allocation1] ss:$4 sm:$0xff] %v1237
    %s1242 = scalar_lea.vmem [#allocation1], 32
    %1243 = vst [vmem:[%s1242] ss:$4 sm:$0xff] %v1238
    %v1244 = vld.sshfl [vmem:[#allocation1] sm:$0xff pattern:$0x73625140]
    %v1245 = vld.sshfl [vmem:[#allocation1 + $0x8] sm:$0xff pattern:$0x73625140]
    %v1246 = vld.sshfl [vmem:[#allocation1 + $0x10] sm:$0xff pattern:$0x73625140]
    %v1247 = vld.sshfl [vmem:[#allocation1 + $0x18] sm:$0xff pattern:$0x73625140]
    %v1248 = vld.sshfl [vmem:[#allocation1 + $0x20] sm:$0xff pattern:$0x73625140]
    %v1249 = vld.sshfl [vmem:[#allocation1 + $0x28] sm:$0xff pattern:$0x73625140]
    %v1256 = vpack.c.bf16 %v1244, %v1244
    %v1257 = vpack.c.bf16 %v1245, %v1245
    %v1258 = vpack.c.bf16 %v1246, %v1246
    %v1259 = vpack.c.bf16 %v1247, %v1247
    %v1260 = vpack.c.bf16 %v1248, %v1248
    %v1261 = vpack.c.bf16 %v1249, %v1249
    %1262 = vmatpush.bf16.msra.mxu0 %v498
    %1263 = vmatpush.bf16.msra.mxu0 %v496
    %1264 = vmatpush.bf16.msra.mxu0 %v494
    %1265 = vmatpush.bf16.msra.mxu0 %v492
    %1266 = vmatpush.bf16.msra.mxu0 %v490
    %1267 = vmatpush.bf16.msra.mxu0 %v488
    %1268 = vmatpush.bf16.msra.mxu0 %v486
    %1269 = vmatpush.bf16.msra.mxu0 %v484
    %1270 = vmatmul.bf16.gmra.mxu0 %v1256
    %v1271 = vpop.f32.mrf.mxu0
    %v1272 = vadd.f32 0.0, %v1271
    %v1273 = vpop.f32.mrf.mxu0
    %1274 = vdwg.mxu0
    %1275 = vmatpush.bf16.msra.mxu0 %v514
    %1276 = vmatpush.bf16.msra.mxu0 %v512
    %1277 = vmatpush.bf16.msra.mxu0 %v510
    %1278 = vmatpush.bf16.msra.mxu0 %v508
    %1279 = vmatpush.bf16.msra.mxu0 %v506
    %1280 = vmatpush.bf16.msra.mxu0 %v504
    %1281 = vmatpush.bf16.msra.mxu0 %v502
    %1282 = vmatpush.bf16.msra.mxu0 %v500
    %1283 = vmatmul.bf16.gmra.mxu0 %v1257
    %v1284 = vpop.f32.mrf.mxu0
    %v1285 = vadd.f32 %v1272, %v1284
    %v1286 = vpop.f32.mrf.mxu0
    %1287 = vdwg.mxu0
    %1288 = vmatpush.bf16.msra.mxu0 %v530
    %1289 = vmatpush.bf16.msra.mxu0 %v528
    %1290 = vmatpush.bf16.msra.mxu0 %v526
    %1291 = vmatpush.bf16.msra.mxu0 %v524
    %1292 = vmatpush.bf16.msra.mxu0 %v522
    %1293 = vmatpush.bf16.msra.mxu0 %v520
    %1294 = vmatpush.bf16.msra.mxu0 %v518
    %1295 = vmatpush.bf16.msra.mxu0 %v516
    %1296 = vmatmul.bf16.gmra.mxu0 %v1258
    %v1297 = vpop.f32.mrf.mxu0
    %v1298 = vadd.f32 %v1285, %v1297
    %v1299 = vpop.f32.mrf.mxu0
    %1300 = vdwg.mxu0
    %1301 = vmatpush.bf16.msra.mxu0 %v546
    %1302 = vmatpush.bf16.msra.mxu0 %v544
    %1303 = vmatpush.bf16.msra.mxu0 %v542
    %1304 = vmatpush.bf16.msra.mxu0 %v540
    %1305 = vmatpush.bf16.msra.mxu0 %v538
    %1306 = vmatpush.bf16.msra.mxu0 %v536
    %1307 = vmatpush.bf16.msra.mxu0 %v534
    %1308 = vmatpush.bf16.msra.mxu0 %v532
    %1309 = vmatmul.bf16.gmra.mxu0 %v1259
    %v1310 = vpop.f32.mrf.mxu0
    %v1311 = vadd.f32 %v1298, %v1310
    %v1312 = vpop.f32.mrf.mxu0
    %1313 = vdwg.mxu0
    %1314 = vmatpush.bf16.msra.mxu0 %v562
    %1315 = vmatpush.bf16.msra.mxu0 %v560
    %1316 = vmatpush.bf16.msra.mxu0 %v558
    %1317 = vmatpush.bf16.msra.mxu0 %v556
    %1318 = vmatpush.bf16.msra.mxu0 %v554
    %1319 = vmatpush.bf16.msra.mxu0 %v552
    %1320 = vmatpush.bf16.msra.mxu0 %v550
    %1321 = vmatpush.bf16.msra.mxu0 %v548
    %1322 = vmatmul.bf16.gmra.mxu0 %v1260
    %v1323 = vpop.f32.mrf.mxu0
    %v1324 = vadd.f32 %v1311, %v1323
    %v1325 = vpop.f32.mrf.mxu0
    %1326 = vdwg.mxu0
    %1327 = vmatpush.bf16.msra.mxu0 %v578
    %1328 = vmatpush.bf16.msra.mxu0 %v576
    %1329 = vmatpush.bf16.msra.mxu0 %v574
    %1330 = vmatpush.bf16.msra.mxu0 %v572
    %1331 = vmatpush.bf16.msra.mxu0 %v570
    %1332 = vmatpush.bf16.msra.mxu0 %v568
    %1333 = vmatpush.bf16.msra.mxu0 %v566
    %1334 = vmatpush.bf16.msra.mxu0 %v564
    %1335 = vmatmul.bf16.gmra.mxu0 %v1261
    %v1336 = vpop.f32.mrf.mxu0
    %v1337 = vadd.f32 %v1324, %v1336
    %v1338 = vpop.f32.mrf.mxu0
    %1339 = vdwg.mxu0
    %1340 = vmatpush.bf16.msra.mxu0 %v499
    %1341 = vmatpush.bf16.msra.mxu0 %v497
    %1342 = vmatpush.bf16.msra.mxu0 %v495
    %1343 = vmatpush.bf16.msra.mxu0 %v493
    %1344 = vmatpush.bf16.msra.mxu0 %v491
    %1345 = vmatpush.bf16.msra.mxu0 %v489
    %1346 = vmatpush.bf16.msra.mxu0 %v487
    %1347 = vmatpush.bf16.msra.mxu0 %v485
    %1348 = vmatmul.bf16.gmra.mxu0 %v1256
    %v1349 = vpop.f32.mrf.mxu0
    %v1350 = vadd.f32 0.0, %v1349
    %v1351 = vpop.f32.mrf.mxu0
    %1352 = vdwg.mxu0
    %1353 = vmatpush.bf16.msra.mxu0 %v515
    %1354 = vmatpush.bf16.msra.mxu0 %v513
    %1355 = vmatpush.bf16.msra.mxu0 %v511
    %1356 = vmatpush.bf16.msra.mxu0 %v509
    %1357 = vmatpush.bf16.msra.mxu0 %v507
    %1358 = vmatpush.bf16.msra.mxu0 %v505
    %1359 = vmatpush.bf16.msra.mxu0 %v503
    %1360 = vmatpush.bf16.msra.mxu0 %v501
    %1361 = vmatmul.bf16.gmra.mxu0 %v1257
    %v1362 = vpop.f32.mrf.mxu0
    %v1363 = vadd.f32 %v1350, %v1362
    %v1364 = vpop.f32.mrf.mxu0
    %1365 = vdwg.mxu0
    %1366 = vmatpush.bf16.msra.mxu0 %v531
    %1367 = vmatpush.bf16.msra.mxu0 %v529
    %1368 = vmatpush.bf16.msra.mxu0 %v527
    %1369 = vmatpush.bf16.msra.mxu0 %v525
    %1370 = vmatpush.bf16.msra.mxu0 %v523
    %1371 = vmatpush.bf16.msra.mxu0 %v521
    %1372 = vmatpush.bf16.msra.mxu0 %v519
    %1373 = vmatpush.bf16.msra.mxu0 %v517
    %1374 = vmatmul.bf16.gmra.mxu0 %v1258
    %v1375 = vpop.f32.mrf.mxu0
    %v1376 = vadd.f32 %v1363, %v1375
    %v1377 = vpop.f32.mrf.mxu0
    %1378 = vdwg.mxu0
    %1379 = vmatpush.bf16.msra.mxu0 %v547
    %1380 = vmatpush.bf16.msra.mxu0 %v545
    %1381 = vmatpush.bf16.msra.mxu0 %v543
    %1382 = vmatpush.bf16.msra.mxu0 %v541
    %1383 = vmatpush.bf16.msra.mxu0 %v539
    %1384 = vmatpush.bf16.msra.mxu0 %v537
    %1385 = vmatpush.bf16.msra.mxu0 %v535
    %1386 = vmatpush.bf16.msra.mxu0 %v533
    %1387 = vmatmul.bf16.gmra.mxu0 %v1259
    %v1388 = vpop.f32.mrf.mxu0
    %v1389 = vadd.f32 %v1376, %v1388
    %v1390 = vpop.f32.mrf.mxu0
    %1391 = vdwg.mxu0
    %1392 = vmatpush.bf16.msra.mxu0 %v563
    %1393 = vmatpush.bf16.msra.mxu0 %v561
    %1394 = vmatpush.bf16.msra.mxu0 %v559
    %1395 = vmatpush.bf16.msra.mxu0 %v557
    %1396 = vmatpush.bf16.msra.mxu0 %v555
    %1397 = vmatpush.bf16.msra.mxu0 %v553
    %1398 = vmatpush.bf16.msra.mxu0 %v551
    %1399 = vmatpush.bf16.msra.mxu0 %v549
    %1400 = vmatmul.bf16.gmra.mxu0 %v1260
    %v1401 = vpop.f32.mrf.mxu0
    %v1402 = vadd.f32 %v1389, %v1401
    %v1403 = vpop.f32.mrf.mxu0
    %1404 = vdwg.mxu0
    %1405 = vmatpush.bf16.msra.mxu0 %v579
    %1406 = vmatpush.bf16.msra.mxu0 %v577
    %1407 = vmatpush.bf16.msra.mxu0 %v575
    %1408 = vmatpush.bf16.msra.mxu0 %v573
    %1409 = vmatpush.bf16.msra.mxu0 %v571
    %1410 = vmatpush.bf16.msra.mxu0 %v569
    %1411 = vmatpush.bf16.msra.mxu0 %v567
    %1412 = vmatpush.bf16.msra.mxu0 %v565
    %1413 = vmatmul.bf16.gmra.mxu0 %v1261
    %v1414 = vpop.f32.mrf.mxu0
    %v1415 = vadd.f32 %v1402, %v1414
    %v1416 = vpop.f32.mrf.mxu0
    %1417 = vdwg.mxu0
    %v1418 = vpack.c.bf16 %v1337, %v1337
    %v1419 = vpack.c.bf16 %v1415, %v1415
    %v1421 = vsel %vm1074, %v1419, 0
    %1423 = vmatpush.bf16.msra.mxu0 %v1006
    %1424 = vmatpush.bf16.msra.mxu0 %v1002
    %1425 = vmatpush.bf16.msra.mxu0 %v998
    %1426 = vmatpush.bf16.msra.mxu0 %v994
    %1427 = vmatpush.bf16.msra.mxu0 %v990
    %1428 = vmatpush.bf16.msra.mxu0 %v986
    %1429 = vmatpush.bf16.msra.mxu0 %v982
    %1430 = vmatpush.bf16.msra.mxu0 %v978
    %1431 = vmatmul.bf16.gmra.mxu0 %v1418
    %v1432 = vpop.f32.mrf.mxu0
    %v1433 = vadd.f32 0.0, %v1432
    %v1434 = vpop.f32.mrf.mxu0
    %1435 = vdwg.mxu0
    %1436 = vmatpush.bf16.msra.mxu0 0
    %1437 = vmatpush.bf16.msra.mxu0 0
    %1438 = vmatpush.bf16.msra.mxu0 0
    %1439 = vmatpush.bf16.msra.mxu0 0
    %1440 = vmatpush.bf16.msra.mxu0 %v1022
    %1441 = vmatpush.bf16.msra.mxu0 %v1018
    %1442 = vmatpush.bf16.msra.mxu0 %v1014
    %1443 = vmatpush.bf16.msra.mxu0 %v1010
    %1444 = vmatmul.bf16.gmra.mxu0 %v1421
    %v1445 = vpop.f32.mrf.mxu0
    %v1446 = vadd.f32 %v1433, %v1445
    %v1447 = vpop.f32.mrf.mxu0
    %1448 = vdwg.mxu0
    %1449 = vmatpush.bf16.msra.mxu0 %v1007
    %1450 = vmatpush.bf16.msra.mxu0 %v1003
    %1451 = vmatpush.bf16.msra.mxu0 %v999
    %1452 = vmatpush.bf16.msra.mxu0 %v995
    %1453 = vmatpush.bf16.msra.mxu0 %v991
    %1454 = vmatpush.bf16.msra.mxu0 %v987
    %1455 = vmatpush.bf16.msra.mxu0 %v983
    %1456 = vmatpush.bf16.msra.mxu0 %v979
    %1457 = vmatmul.bf16.gmra.mxu0 %v1418
    %v1458 = vpop.f32.mrf.mxu0
    %v1459 = vadd.f32 0.0, %v1458
    %v1460 = vpop.f32.mrf.mxu0
    %1461 = vdwg.mxu0
    %1462 = vmatpush.bf16.msra.mxu0 0
    %1463 = vmatpush.bf16.msra.mxu0 0
    %1464 = vmatpush.bf16.msra.mxu0 0
    %1465 = vmatpush.bf16.msra.mxu0 0
    %1466 = vmatpush.bf16.msra.mxu0 %v1023
    %1467 = vmatpush.bf16.msra.mxu0 %v1019
    %1468 = vmatpush.bf16.msra.mxu0 %v1015
    %1469 = vmatpush.bf16.msra.mxu0 %v1011
    %1470 = vmatmul.bf16.gmra.mxu0 %v1421
    %v1471 = vpop.f32.mrf.mxu0
    %v1472 = vadd.f32 %v1459, %v1471
    %v1473 = vpop.f32.mrf.mxu0
    %1474 = vdwg.mxu0
    %1475 = vmatpush.bf16.msra.mxu0 %v1008
    %1476 = vmatpush.bf16.msra.mxu0 %v1004
    %1477 = vmatpush.bf16.msra.mxu0 %v1000
    %1478 = vmatpush.bf16.msra.mxu0 %v996
    %1479 = vmatpush.bf16.msra.mxu0 %v992
    %1480 = vmatpush.bf16.msra.mxu0 %v988
    %1481 = vmatpush.bf16.msra.mxu0 %v984
    %1482 = vmatpush.bf16.msra.mxu0 %v980
    %1483 = vmatmul.bf16.gmra.mxu0 %v1418
    %v1484 = vpop.f32.mrf.mxu0
    %v1485 = vadd.f32 0.0, %v1484
    %v1486 = vpop.f32.mrf.mxu0
    %1487 = vdwg.mxu0
    %1488 = vmatpush.bf16.msra.mxu0 0
    %1489 = vmatpush.bf16.msra.mxu0 0
    %1490 = vmatpush.bf16.msra.mxu0 0
    %1491 = vmatpush.bf16.msra.mxu0 0
    %1492 = vmatpush.bf16.msra.mxu0 %v1024
    %1493 = vmatpush.bf16.msra.mxu0 %v1020
    %1494 = vmatpush.bf16.msra.mxu0 %v1016
    %1495 = vmatpush.bf16.msra.mxu0 %v1012
    %1496 = vmatmul.bf16.gmra.mxu0 %v1421
    %v1497 = vpop.f32.mrf.mxu0
    %v1498 = vadd.f32 %v1485, %v1497
    %v1499 = vpop.f32.mrf.mxu0
    %1500 = vdwg.mxu0
    %1501 = vmatpush.bf16.msra.mxu0 %v1009
    %1502 = vmatpush.bf16.msra.mxu0 %v1005
    %1503 = vmatpush.bf16.msra.mxu0 %v1001
    %1504 = vmatpush.bf16.msra.mxu0 %v997
    %1505 = vmatpush.bf16.msra.mxu0 %v993
    %1506 = vmatpush.bf16.msra.mxu0 %v989
    %1507 = vmatpush.bf16.msra.mxu0 %v985
    %1508 = vmatpush.bf16.msra.mxu0 %v981
    %1509 = vmatmul.bf16.gmra.mxu0 %v1418
    %v1510 = vpop.f32.mrf.mxu0
    %v1511 = vadd.f32 0.0, %v1510
    %v1512 = vpop.f32.mrf.mxu0
    %1513 = vdwg.mxu0
    %1514 = vmatpush.bf16.msra.mxu0 0
    %1515 = vmatpush.bf16.msra.mxu0 0
    %1516 = vmatpush.bf16.msra.mxu0 0
    %1517 = vmatpush.bf16.msra.mxu0 0
    %1518 = vmatpush.bf16.msra.mxu0 %v1025
    %1519 = vmatpush.bf16.msra.mxu0 %v1021
    %1520 = vmatpush.bf16.msra.mxu0 %v1017
    %1521 = vmatpush.bf16.msra.mxu0 %v1013
    %1522 = vmatmul.bf16.gmra.mxu0 %v1421
    %v1523 = vpop.f32.mrf.mxu0
    %v1524 = vadd.f32 %v1511, %v1523
    %v1525 = vpop.f32.mrf.mxu0
    %1526 = vdwg.mxu0
    %v1527 = vmul.f32 %v1446, %v1183
    %v1528 = vmul.f32 %v1472, %v1184
    %v1529 = vmul.f32 %v1498, %v1185
    %v1530 = vmul.f32 %v1524, %v1186
    %v1531 = vadd.f32 %v1527, %v1196
    %v1532 = vadd.f32 %v1528, %v1197
    %v1533 = vadd.f32 %v1529, %v1198
    %v1534 = vadd.f32 %v1530, %v1199
    %v1535 = vmul.f32 %v1531, %v1531
    %v1536 = vmul.f32 %v1532, %v1532
    %v1537 = vmul.f32 %v1533, %v1533
    %v1538 = vmul.f32 %v1534, %v1534
    %v1539 = vsel %vm1212, %v1535, 0.0
    %v1540 = vsel %vm1212, %v1536, 0.0
    %v1541 = vadd.f32 %v1539, %v1540
    %v1542 = vsel %vm1212, %v1537, 0.0
    %v1543 = vadd.f32 %v1541, %v1542
    %v1544 = vsel %vm1212, %v1538, 0.0
    %v1545 = vadd.f32 %v1543, %v1544
    %1546 = vadd.xlane.f32.xlu0 %v1545
    %v1547 = vpop.xlane.xlu0 %1546
    %v1548 = vadd.f32 %v1547, 1e-08
    %v1549 = vrsqrt.pop %v1548
    %v1550 = vmul.f32 %v1549, %v1548
    %v1551 = vmul.f32 %v1550, %v1549
    %v1552 = vmul.f32 0.5, %v1551
    %v1553 = vsub.f32 1.5, %v1552
    %v1554 = vmul.f32 %v1549, %v1553
    %vm1555 = vweird.f32 %v1548
    %vm1556 = vweird.f32 %v1549
    %vm1557 = vmor %vm1555, %vm1556
    %v1558 = vsel %vm1557, %v1549, %v1554
    %v1559 = vmul.f32 %v1531, %v1558
    %v1560 = vmul.f32 %v1532, %v1558
    %v1561 = vmul.f32 %v1533, %v1558
    %v1562 = vmul.f32 %v1534, %v1558
    %1563 = vmatpush.xpose.msra.mxu0 0.0
    %1564 = vmatpush.xpose.msra.mxu0 0.0
    %1565 = vmatpush.xpose.msra.mxu0 0.0
    %1566 = vmatpush.xpose.msra.mxu0 0.0
    %1567 = vmatpush.xpose.msra.mxu0 0.0
    %1568 = vmatpush.xpose.msra.mxu0 0.0
    %1569 = vmatpush.xpose.msra.mxu0 0.0
    %1570 = vmatpush.xpose.msra.mxu0 0.0
    %1571 = vmatpush.xpose.msra.mxu0 0.0
    %1572 = vmatpush.xpose.msra.mxu0 0.0
    %1573 = vmatpush.xpose.msra.mxu0 0.0
    %1574 = vmatpush.xpose.msra.mxu0 0.0
    %1575 = vmatpush.xpose.msra.mxu0 0.0
    %1576 = vmatpush.xpose.msra.mxu0 0.0
    %1577 = vmatpush.xpose.msra.mxu0 0.0
    %1578 = vmatpush.xpose.msra.mxu0 %v1233
    %1579 = vmatmul.f32.gmra.mxu0 %v1559
    %v1580 = vpop.f32.mrf.mxu0
    %v1581 = vadd.f32 0.0, %v1580
    %1582 = vdwg.mxu0
    %1583 = vmatpush.xpose.msra.mxu0 0.0
    %1584 = vmatpush.xpose.msra.mxu0 0.0
    %1585 = vmatpush.xpose.msra.mxu0 0.0
    %1586 = vmatpush.xpose.msra.mxu0 0.0
    %1587 = vmatpush.xpose.msra.mxu0 0.0
    %1588 = vmatpush.xpose.msra.mxu0 0.0
    %1589 = vmatpush.xpose.msra.mxu0 0.0
    %1590 = vmatpush.xpose.msra.mxu0 0.0
    %1591 = vmatpush.xpose.msra.mxu0 0.0
    %1592 = vmatpush.xpose.msra.mxu0 0.0
    %1593 = vmatpush.xpose.msra.mxu0 0.0
    %1594 = vmatpush.xpose.msra.mxu0 0.0
    %1595 = vmatpush.xpose.msra.mxu0 0.0
    %1596 = vmatpush.xpose.msra.mxu0 0.0
    %1597 = vmatpush.xpose.msra.mxu0 0.0
    %1598 = vmatpush.xpose.msra.mxu0 %v1234
    %1599 = vmatmul.f32.gmra.mxu0 %v1560
    %v1600 = vpop.f32.mrf.mxu0
    %v1601 = vadd.f32 %v1581, %v1600
    %1602 = vdwg.mxu0
    %1603 = vmatpush.xpose.msra.mxu0 0.0
    %1604 = vmatpush.xpose.msra.mxu0 0.0
    %1605 = vmatpush.xpose.msra.mxu0 0.0
    %1606 = vmatpush.xpose.msra.mxu0 0.0
    %1607 = vmatpush.xpose.msra.mxu0 0.0
    %1608 = vmatpush.xpose.msra.mxu0 0.0
    %1609 = vmatpush.xpose.msra.mxu0 0.0
    %1610 = vmatpush.xpose.msra.mxu0 0.0
    %1611 = vmatpush.xpose.msra.mxu0 0.0
    %1612 = vmatpush.xpose.msra.mxu0 0.0
    %1613 = vmatpush.xpose.msra.mxu0 0.0
    %1614 = vmatpush.xpose.msra.mxu0 0.0
    %1615 = vmatpush.xpose.msra.mxu0 0.0
    %1616 = vmatpush.xpose.msra.mxu0 0.0
    %1617 = vmatpush.xpose.msra.mxu0 0.0
    %1618 = vmatpush.xpose.msra.mxu0 %v1235
    %1619 = vmatmul.f32.gmra.mxu0 %v1561
    %v1620 = vpop.f32.mrf.mxu0
    %v1621 = vadd.f32 %v1601, %v1620
    %1622 = vdwg.mxu0
    %1623 = vmatpush.xpose.msra.mxu0 0.0
    %1624 = vmatpush.xpose.msra.mxu0 0.0
    %1625 = vmatpush.xpose.msra.mxu0 0.0
    %1626 = vmatpush.xpose.msra.mxu0 0.0
    %1627 = vmatpush.xpose.msra.mxu0 0.0
    %1628 = vmatpush.xpose.msra.mxu0 0.0
    %1629 = vmatpush.xpose.msra.mxu0 0.0
    %1630 = vmatpush.xpose.msra.mxu0 0.0
    %1631 = vmatpush.xpose.msra.mxu0 0.0
    %1632 = vmatpush.xpose.msra.mxu0 0.0
    %1633 = vmatpush.xpose.msra.mxu0 0.0
    %1634 = vmatpush.xpose.msra.mxu0 0.0
    %1635 = vmatpush.xpose.msra.mxu0 0.0
    %1636 = vmatpush.xpose.msra.mxu0 0.0
    %1637 = vmatpush.xpose.msra.mxu0 0.0
    %1638 = vmatpush.xpose.msra.mxu0 %v1236
    %1639 = vmatmul.f32.gmra.mxu0 %v1562
    %v1640 = vpop.f32.mrf.mxu0
    %v1641 = vadd.f32 %v1621, %v1640
    %1642 = vdwg.mxu0
    %v1643 = vlaneseq
    %v1644 = vshrl.u32 %v1643, 7
    %v1645 = vlaneseq
    %v1646 = vand.u32 %v1645, 127
    %vm1647 = vcmp.eq.s32.totalorder %v1644, %v1646
    %v1648 = vsel %vm1647, %v1641, 0.0
    %vm1649 = vcmask 9216
    %v1650 = vsel %vm1649, %v1648, 0.0
    %v1651 = vrot.slane %v1650, 4
    %v1652 = vadd.f32 %v1650, %v1651
    %v1653 = vrot.slane %v1652, 2
    %v1654 = vadd.f32 %v1652, %v1653
    %v1655 = vrot.slane %v1654, 1
    %v1656 = vadd.f32 %v1654, %v1655
    %v1657 = vsub.f32 1.0, %v1656
    %vm1658 = vcmask 8192
    %1659 = vst.msk [vmem:[#allocation2] sm:$0x1] %vm1658, %v1657
    // Predicated region
    $region26: #{tpu_custom_call.1} parent=1 // pred_check
      _
    $region27: #{tpu_custom_call.1} parent=1 // pred_check_branch
      %1661 = sbr.rel (0) target = $region29
    $region28: #{tpu_custom_call.1} parent=1 // pred_region
      %1663 = vsyncadd [#allocation3], 0
      %s1665 = sshll.u32 [#allocation2], 4
      %s1666 = int_to_ptr.vmem [resolvable:$true] %s1665
      %s1667 = sshll.u32 %s6, 4
      %s1668 = int_to_ptr.hbm [resolvable:$true] %s1667
      %1670 = dma.vmem_to_hbm [thread:$0]  %s1666, 16, %s1668, [#allocation3]
    $region29: #{tpu_custom_call.1} parent=1 // pred_fallthru
      _
    // Predicated region
    $region30: #{tpu_custom_call.1} parent=1 // pred_check
      _
    $region31: #{tpu_custom_call.1} parent=1 // pred_check_branch
      %1672 = sbr.rel (0) target = $region33
    $region32: #{tpu_custom_call.1} parent=1 // pred_region
      %1674 = dma.done [#allocation3], 16
    $region33: #{tpu_custom_call.1} parent=1 // pred_fallthru
      _
    %1675 = vsyncpa [#allocation3], 1

</llo_original>
